<compile_context>
chip_gen: v7x
topology: tpu7x:2x2x1
jax: 0.10.0
libtpu: 0.0.40
codegen_flags: <defaults>
</compile_context>

<pallas_src>
import functools

import jax
import jax.numpy as jnp
from jax.experimental import pallas as pl
from jax.experimental.pallas import tpu as pltpu

F32 = jnp.float32
BF16 = jnp.bfloat16
RESNET_LAYER_CHANNELS = (64, 128, 256, 512)   # => pretrain_dim = 960


# ---------------------------------------------------------------------------
# Pallas kernels
# ---------------------------------------------------------------------------
def _make_matmul_kernel(act):
    """Single-pass (K untiled) matmul + bias + activation epilogue."""
    def kernel(x_ref, w_ref, b_ref, o_ref):
        r = jnp.dot(x_ref[...], w_ref[...], preferred_element_type=jnp.float32)
        r = r + b_ref[...]
        if act == "relu":
            r = jnp.maximum(r, 0.0)
        elif act == "sigmoid":
            r = jax.nn.sigmoid(r)
        elif act == "tanh":
            r = jnp.tanh(r)
        o_ref[...] = r.astype(o_ref.dtype)
    return kernel


def _pick_tm(M, K, cap=2048):
    """Row tile: ~4 MB bf16 x-block, capped; single full-M block when M is small."""
    target = (4 * 1024 * 1024) // max(2 * K, 1)
    target = max(256, min(cap, (target // 256) * 256))
    return M if M <= target else target


def matmul_bias_act(x, w, b, act="none", out_dtype=F32):
    """y = act(x @ w + b).  x:(M,K)  w:(K,N)  b:(N,).  bf16 operands, f32 accumulate.

    K and N are kept as full (untiled) block dims so there is no reduction grid axis,
    no accumulator scratch, and no padding of the operands or the output."""
    M, K = x.shape
    N = w.shape[1]
    xb = x.astype(BF16)
    wb = w.astype(BF16)
    bf = b.reshape(1, N).astype(F32)
    tm = _pick_tm(M, K)
    grid_m = pl.cdiv(M, tm)
    return pl.pallas_call(
        _make_matmul_kernel(act),
        out_shape=jax.ShapeDtypeStruct((M, N), out_dtype),
        grid=(grid_m,),
        in_specs=[
            pl.BlockSpec((tm, K), lambda i: (i, 0)),
            pl.BlockSpec((K, N), lambda i: (0, 0)),
            pl.BlockSpec((1, N), lambda i: (0, 0)),
        ],
        out_specs=pl.BlockSpec((tm, N), lambda i: (i, 0)),
        compiler_params=pltpu.CompilerParams(
            dimension_semantics=("parallel",)),
    )(xb, wb, bf)


def _make_mean_kernel(relu):
    """o = (relu?)(mean(x, axis=1)) * scale + shift  (AvgPool / AdaptiveAvgPool + BN)."""
    def kernel(x_ref, s_ref, t_ref, o_ref):
        m = jnp.mean(x_ref[...].astype(jnp.float32), axis=1)
        if relu:
            m = jnp.maximum(m, 0.0)
        o_ref[...] = (m * s_ref[...] + t_ref[...]).astype(o_ref.dtype)
    return kernel


def mean_axis1(x3, scale=None, shift=None, relu=False):
    """x3:(M,K,C) -> (M,C).  Mean over axis 1 with fused ReLU + per-channel affine."""
    M, K, C = x3.shape
    if scale is None:
        scale = jnp.ones((C,), F32)
    if shift is None:
        shift = jnp.zeros((C,), F32)
    tm = M if M <= 512 else 512
    grid_m = pl.cdiv(M, tm)
    return pl.pallas_call(
        _make_mean_kernel(relu),
        out_shape=jax.ShapeDtypeStruct((M, C), F32),
        grid=(grid_m,),
        in_specs=[
            pl.BlockSpec((tm, K, C), lambda i: (i, 0, 0)),
            pl.BlockSpec((1, C), lambda i: (0, 0)),
            pl.BlockSpec((1, C), lambda i: (0, 0)),
        ],
        out_specs=pl.BlockSpec((tm, C), lambda i: (i, 0)),
        compiler_params=pltpu.CompilerParams(
            dimension_semantics=("parallel",)),
    )(x3, scale.reshape(1, C).astype(F32), shift.reshape(1, C).astype(F32))


# ---------------------------------------------------------------------------
# Conv / pool helpers (im2col glue in JAX -> Pallas compute)
# ---------------------------------------------------------------------------
def im2col_nhwc(x, kh, kw, sh, sw, ph, pw):
    N, H, W, C = x.shape
    OH = (H + 2 * ph - kh) // sh + 1
    OW = (W + 2 * pw - kw) // sw + 1
    xp = jnp.pad(x, ((0, 0), (ph, ph), (pw, pw), (0, 0)))
    cols = []
    for i in range(kh):
        for j in range(kw):
            cols.append(xp[:, i:i + sh * (OH - 1) + 1:sh,
                            j:j + sw * (OW - 1) + 1:sw, :])
    patches = jnp.stack(cols, axis=3)          # (N, OH, OW, kh*kw, C)
    return patches, OH, OW


def conv2d(x, w_oihw, b, stride, padding, act="none", out_dtype=BF16):
    Cout, Cin, kh, kw = w_oihw.shape
    patches, OH, OW = im2col_nhwc(x.astype(BF16), kh, kw, stride[0], stride[1],
                                  padding[0], padding[1])
    N = x.shape[0]
    pm = patches.reshape(N * OH * OW, kh * kw * Cin)
    wm = jnp.transpose(w_oihw, (2, 3, 1, 0)).reshape(kh * kw * Cin, Cout)
    y = matmul_bias_act(pm, wm, b, act=act, out_dtype=out_dtype)
    return y.reshape(N, OH, OW, Cout)


def _deconv_as_conv3x3_weight(w_iohw):
    """ConvTranspose2d(Cin,Cout,4,2,1) == 3x3/s1/p1 conv emitting 4 sub-pixel phases.

    Returns an effective weight of shape (9*Cin, 4*Cout) where output channel
    (ph*2 + pw)*Cout + co is the phase-(ph,pw) result."""
    Cin, Cout = w_iohw.shape[0], w_iohw.shape[1]
    weff = jnp.zeros((3, 3, Cin, 2, 2, Cout), w_iohw.dtype)
    # (phase, 3x3 patch position, original 4-tap kernel index)
    taps = ((0, 0, 3), (0, 1, 1), (1, 1, 2), (1, 2, 0))
    for ph, r, kh in taps:
        for pw_, s, kw_ in taps:
            weff = weff.at[r, s, :, ph, pw_, :].set(w_iohw[:, :, kh, kw_])
    return weff.reshape(9 * Cin, 4 * Cout)


def conv_transpose2d(x, w_iohw, b, act="none", out_dtype=BF16):
    """ConvTranspose2d(k=4, s=2, p=1) via sub-pixel 3x3 conv + pixel-shuffle."""
    Cin, Cout = w_iohw.shape[0], w_iohw.shape[1]
    N, H, W, _ = x.shape
    wm = _deconv_as_conv3x3_weight(w_iohw)                       # (9*Cin, 4*Cout)
    bb = jnp.tile(b.reshape(1, Cout), (4, 1)).reshape(4 * Cout)  # bias per phase
    patches, OH, OW = im2col_nhwc(x.astype(BF16), 3, 3, 1, 1, 1, 1)   # OH=H, OW=W
    y = matmul_bias_act(patches.reshape(N * H * W, 9 * Cin), wm, bb,
                        act=act, out_dtype=out_dtype)
    y = y.reshape(N, H, W, 2, 2, Cout)
    y = jnp.transpose(y, (0, 1, 3, 2, 4, 5)).reshape(N, 2 * H, 2 * W, Cout)
    return y


def avg_pool_relu_bn(x, kernel, stride, padding, scale, shift):
    """AvgPool2d (count_include_pad=True, floor) + ReLU + eval-mode BN, one kernel."""
    kh, kw = kernel
    patches, OH, OW = im2col_nhwc(x, kh, kw, stride[0], stride[1],
                                  padding[0], padding[1])
    N, _, _, KK, C = patches.shape
    y = mean_axis1(patches.reshape(N * OH * OW, KK, C), scale, shift, relu=True)
    return y.reshape(N, OH, OW, C)


def global_avg_pool(x):                         # AdaptiveAvgPool2d(1) + flatten
    N, H, W, C = x.shape
    return mean_axis1(x.reshape(N, H * W, C))   # (N, C)


# ---------------------------------------------------------------------------
# Model forward
# ---------------------------------------------------------------------------
def resnet_stub_dense(params, x_nhwc):
    """LayerOut behaviour: pooled+flattened output of layer1..4, concatenated."""
    h = conv2d(x_nhwc, params["stem_w"], params["stem_b"], (4, 4), (0, 0), act="relu")
    feats = []
    for li in range(4):
        h = conv2d(h, params[f"layer{li+1}_w"], params[f"layer{li+1}_b"],
                   (2, 2), (1, 1), act="relu")
        feats.append(global_avg_pool(h))
    return jnp.concatenate(feats, axis=1)       # (B*T, 960)


def cnn_branch(params, dense, B, T):
    # DenseOut.view(B, T, -1).unsqueeze(1): NCHW (B,1,T,D) -> NHWC (B,T,D,1)
    z = dense.reshape(B, T, -1)[..., None]
    conv_strides = ((1, 3), (1, 3), (2, 3))
    for bi in range(3):
        z = conv2d(z, params[f"cnn{bi+1}_w"], params[f"cnn{bi+1}_b"],
                   conv_strides[bi], (1, 1), act="none")
        z = avg_pool_relu_bn(z, (3, 5), (1, 3), (1, 1),
                             params[f"cnn{bi+1}_bn_scale"],
                             params[f"cnn{bi+1}_bn_shift"])
    return global_avg_pool(z)                   # (B, 64)


def decoder_branch(params, dense):
    p = matmul_bias_act(dense, params["proj_w"].T, params["proj_b"],
                        act="none", out_dtype=BF16)
    N = dense.shape[0]
    d = p.reshape(N, 24, 7, 7).transpose(0, 2, 3, 1)   # NCHW view -> NHWC
    for i in range(5):
        act = "tanh" if i == 4 else "relu"             # last ReLU replaced by Tanh
        d = conv_transpose2d(d, params[f"dec{i}_w"], params[f"dec{i}_b"],
                             act=act, out_dtype=F32 if i == 4 else BF16)
    return jnp.transpose(d, (0, 3, 1, 2))              # (B*T, 3, 224, 224) NCHW


def fusion_forward(params, x):
    """x: (B, T, 3, 224, 224) NCHW -> (sigmoid probs (B,n_class), recon like x)."""
    B, T = x.shape[:2]
    xf = x.reshape(B * T, *x.shape[2:])
    x_nhwc = jnp.transpose(xf, (0, 2, 3, 1))
    dense = resnet_stub_dense(params, x_nhwc)          # (B*T, 960)
    cnn_out = cnn_branch(params, dense, B, T)          # (B, 64)
    probs = matmul_bias_act(cnn_out, params["out_w"].T, params["out_b"],
                            act="sigmoid")             # (B, n_class)
    recon = decoder_branch(params, dense).reshape(x.shape)
    return probs, recon


# ---------------------------------------------------------------------------
# Deterministic parameter initialization
# ---------------------------------------------------------------------------
def init_params(key, n_class=5):
    ks = iter(jax.random.split(key, 32))
    eps = 1e-5
    bn_scale = lambda c: jnp.full((c,), 1.0 / jnp.sqrt(1.0 + eps), F32)
    bn_shift = lambda c: jnp.zeros((c,), F32)

    def conv_w(cout, cin, kh, kw):
        fan = float(cin * kh * kw)
        return jax.random.normal(next(ks), (cout, cin, kh, kw), F32) / jnp.sqrt(fan)

    def bias(c):
        return 0.01 * jax.random.normal(next(ks), (c,), F32)

    p = {}
    # synthetic ResNet backbone stub (layer widths 64/128/256/512 -> dim 960)
    p["stem_w"], p["stem_b"] = conv_w(32, 3, 4, 4), bias(32)
    cin = 32
    for li, cout in enumerate(RESNET_LAYER_CHANNELS):
        p[f"layer{li+1}_w"], p[f"layer{li+1}_b"] = conv_w(cout, cin, 3, 3), bias(cout)
        cin = cout
    pretrain_dim = sum(RESNET_LAYER_CHANNELS)          # 960

    # 'cnn' branch: 3 x (Conv2d (3,5) -> AvgPool2d (3,5) -> ReLU -> BatchNorm2d)
    cnn_ch = (1, 4, 16, 64)
    for bi in range(3):
        p[f"cnn{bi+1}_w"] = conv_w(cnn_ch[bi + 1], cnn_ch[bi], 3, 5)
        p[f"cnn{bi+1}_b"] = bias(cnn_ch[bi + 1])
        p[f"cnn{bi+1}_bn_scale"] = bn_scale(cnn_ch[bi + 1])
        p[f"cnn{bi+1}_bn_shift"] = bn_shift(cnn_ch[bi + 1])

    # decoder: Linear(960, 1176) + 5 x ConvTranspose2d(4,2,1) with BN folded in
    p["proj_w"] = (jax.random.normal(next(ks), (3 * 8 * 7 * 7, pretrain_dim), F32)
                   / jnp.sqrt(float(pretrain_dim)))
    p["proj_b"] = bias(3 * 8 * 7 * 7)
    dec_ch = (24, 24, 12, 6, 6, 3)
    for i in range(5):
        ci, co = dec_ch[i], dec_ch[i + 1]
        w = jax.random.normal(next(ks), (ci, co, 4, 4), F32) / jnp.sqrt(float(ci * 16))
        b = bias(co)
        s, t = bn_scale(co), bn_shift(co)              # eval-mode BN folded
        p[f"dec{i}_w"] = w * s[None, :, None, None]
        p[f"dec{i}_b"] = b * s + t

    # OutputLayer: Linear(64, n_class), weight ~ N(0, 0.1), bias = 0 (as in module)
    p["out_w"] = 0.1 * jax.random.normal(next(ks), (n_class, 64), F32)
    p["out_b"] = jnp.zeros((n_class,), F32)
    return p


if __name__ == "__main__":
    key = jax.random.PRNGKey(0)
    pkey, xkey = jax.random.split(key)
    n_class = 5
    B, T = 2, 2
    params = init_params(pkey, n_class)
    # input: B x T x C x W x H; decoder architecture fixes C,W,H = 3,224,224
    x = jax.random.normal(xkey, (B, T, 3, 224, 224), F32)

    fwd = jax.jit(functools.partial(fusion_forward, params))
    probs, recon = fwd(x)
    jax.block_until_ready((probs, recon))

    assert probs.shape == (B, n_class)
    assert recon.shape == x.shape
    assert bool(jnp.all(jnp.isfinite(probs)))
    assert bool(jnp.all(jnp.isfinite(recon)))
    print("KERNEL_OK")
</pallas_src>

<mosaic_0001>
module attributes {stable_mosaic.version = 11 : i64} {
  func.func @kernel(%arg0: i32, %arg1: memref<2048x48xbf16, #tpu.memory_space<vmem>>, %arg2: memref<48x32xbf16, #tpu.memory_space<vmem>>, %arg3: memref<1x32xf32, #tpu.memory_space<vmem>>, %arg4: memref<2048x32xbf16, #tpu.memory_space<vmem>>) attributes {dimension_semantics = [#tpu.dimension_semantics<parallel>], iteration_bounds = array<i64: 7>, scalar_prefetch = 0 : i64, scratch_operands = 0 : i64, tpu.core_type = #tpu.core_type<tc>, window_params = [{transform_indices = @transform_0, window_bounds = array<i64: 2048, 48>}, {pipeline_mode = #tpu.pipeline_mode<synchronous>, transform_indices = @transform_1, window_bounds = array<i64: 48, 32>}, {pipeline_mode = #tpu.pipeline_mode<synchronous>, transform_indices = @transform_2, window_bounds = array<i64: 1, 32>}, {transform_indices = @transform_3, window_bounds = array<i64: 2048, 32>}]} {
    %c0 = arith.constant 0 : index
    %c0_0 = arith.constant 0 : index
    %0 = vector.load %arg1[%c0, %c0_0] : memref<2048x48xbf16, #tpu.memory_space<vmem>>, vector<2048x48xbf16>
    %c0_1 = arith.constant 0 : index
    %c0_2 = arith.constant 0 : index
    %1 = vector.load %arg2[%c0_1, %c0_2] : memref<48x32xbf16, #tpu.memory_space<vmem>>, vector<48x32xbf16>
    %cst = arith.constant dense<0.000000e+00> : vector<2048x32xf32>
    %2 = tpu.matmul %0, %1, %cst {dimension_numbers = #tpu.dot_dimension_numbers<[1], [0], [0], [1], [0, 0, 1, 1], [], []>} : vector<2048x48xbf16>, vector<48x32xbf16>, vector<2048x32xf32> -> vector<2048x32xf32>
    %c0_3 = arith.constant 0 : index
    %c0_4 = arith.constant 0 : index
    %3 = vector.load %arg3[%c0_3, %c0_4] : memref<1x32xf32, #tpu.memory_space<vmem>>, vector<1x32xf32>
    %4 = vector.broadcast %3 : vector<1x32xf32> to vector<2048x32xf32>
    %5 = arith.addf %2, %4 : vector<2048x32xf32>
    %cst_5 = arith.constant 0.000000e+00 : f32
    %6 = vector.broadcast %cst_5 : f32 to vector<2048x32xf32>
    %7 = arith.maximumf %5, %6 : vector<2048x32xf32>
    %8 = arith.truncf %7 : vector<2048x32xf32> to vector<2048x32xbf16>
    %c0_6 = arith.constant 0 : index
    %c0_7 = arith.constant 0 : index
    %9 = vector.load %arg4[%c0_6, %c0_7] : memref<2048x32xbf16, #tpu.memory_space<vmem>>, vector<2048x32xbf16>
    tpu.vector_store %arg4[%c0_6, %c0_7], %8 {strides = array<i32>} : memref<2048x32xbf16, #tpu.memory_space<vmem>>, vector<2048x32xbf16>,
    return
  }
  func.func @transform_0(%arg0: i32) -> (i32, i32) {
    %c0_i32 = arith.constant 0 : i32
    %c0_i32_0 = arith.constant 0 : i32
    return %arg0, %c0_i32 : i32, i32
  }
  func.func @transform_1(%arg0: i32) -> (i32, i32) {
    %c0_i32 = arith.constant 0 : i32
    %c0_i32_0 = arith.constant 0 : i32
    %c0_i32_1 = arith.constant 0 : i32
    return %c0_i32, %c0_i32_0 : i32, i32
  }
  func.func @transform_2(%arg0: i32) -> (i32, i32) {
    %c0_i32 = arith.constant 0 : i32
    %c0_i32_0 = arith.constant 0 : i32
    %c0_i32_1 = arith.constant 0 : i32
    return %c0_i32, %c0_i32_0 : i32, i32
  }
  func.func @transform_3(%arg0: i32) -> (i32, i32) {
    %c0_i32 = arith.constant 0 : i32
    %c0_i32_0 = arith.constant 0 : i32
    return %arg0, %c0_i32 : i32, i32
  }
}

module attributes {stable_mosaic.version = 11 : i64} {
  func.func @kernel(%arg0: i32, %arg1: memref<2048x288xbf16, #tpu.memory_space<vmem>>, %arg2: memref<288x64xbf16, #tpu.memory_space<vmem>>, %arg3: memref<1x64xf32, #tpu.memory_space<vmem>>, %arg4: memref<2048x64xbf16, #tpu.memory_space<vmem>>) attributes {dimension_semantics = [#tpu.dimension_semantics<parallel>], iteration_bounds = array<i64: 2>, scalar_prefetch = 0 : i64, scratch_operands = 0 : i64, tpu.core_type = #tpu.core_type<tc>, window_params = [{transform_indices = @transform_0, window_bounds = array<i64: 2048, 288>}, {pipeline_mode = #tpu.pipeline_mode<synchronous>, transform_indices = @transform_1, window_bounds = array<i64: 288, 64>}, {pipeline_mode = #tpu.pipeline_mode<synchronous>, transform_indices = @transform_2, window_bounds = array<i64: 1, 64>}, {transform_indices = @transform_3, window_bounds = array<i64: 2048, 64>}]} {
    %c0 = arith.constant 0 : index
    %c0_0 = arith.constant 0 : index
    %0 = vector.load %arg1[%c0, %c0_0] : memref<2048x288xbf16, #tpu.memory_space<vmem>>, vector<2048x288xbf16>
    %c0_1 = arith.constant 0 : index
    %c0_2 = arith.constant 0 : index
    %1 = vector.load %arg2[%c0_1, %c0_2] : memref<288x64xbf16, #tpu.memory_space<vmem>>, vector<288x64xbf16>
    %cst = arith.constant dense<0.000000e+00> : vector<2048x64xf32>
    %2 = tpu.matmul %0, %1, %cst {dimension_numbers = #tpu.dot_dimension_numbers<[1], [0], [0], [1], [0, 0, 1, 1], [], []>} : vector<2048x288xbf16>, vector<288x64xbf16>, vector<2048x64xf32> -> vector<2048x64xf32>
    %c0_3 = arith.constant 0 : index
    %c0_4 = arith.constant 0 : index
    %3 = vector.load %arg3[%c0_3, %c0_4] : memref<1x64xf32, #tpu.memory_space<vmem>>, vector<1x64xf32>
    %4 = vector.broadcast %3 : vector<1x64xf32> to vector<2048x64xf32>
    %5 = arith.addf %2, %4 : vector<2048x64xf32>
    %cst_5 = arith.constant 0.000000e+00 : f32
    %6 = vector.broadcast %cst_5 : f32 to vector<2048x64xf32>
    %7 = arith.maximumf %5, %6 : vector<2048x64xf32>
    %8 = arith.truncf %7 : vector<2048x64xf32> to vector<2048x64xbf16>
    %c0_6 = arith.constant 0 : index
    %c0_7 = arith.constant 0 : index
    %9 = vector.load %arg4[%c0_6, %c0_7] : memref<2048x64xbf16, #tpu.memory_space<vmem>>, vector<2048x64xbf16>
    tpu.vector_store %arg4[%c0_6, %c0_7], %8 {strides = array<i32>} : memref<2048x64xbf16, #tpu.memory_space<vmem>>, vector<2048x64xbf16>,
    return
  }
  func.func @transform_0(%arg0: i32) -> (i32, i32) {
    %c0_i32 = arith.constant 0 : i32
    %c0_i32_0 = arith.constant 0 : i32
    return %arg0, %c0_i32 : i32, i32
  }
  func.func @transform_1(%arg0: i32) -> (i32, i32) {
    %c0_i32 = arith.constant 0 : i32
    %c0_i32_0 = arith.constant 0 : i32
    %c0_i32_1 = arith.constant 0 : i32
    return %c0_i32, %c0_i32_0 : i32, i32
  }
  func.func @transform_2(%arg0: i32) -> (i32, i32) {
    %c0_i32 = arith.constant 0 : i32
    %c0_i32_0 = arith.constant 0 : i32
    %c0_i32_1 = arith.constant 0 : i32
    return %c0_i32, %c0_i32_0 : i32, i32
  }
  func.func @transform_3(%arg0: i32) -> (i32, i32) {
    %c0_i32 = arith.constant 0 : i32
    %c0_i32_0 = arith.constant 0 : i32
    return %arg0, %c0_i32 : i32, i32
  }
}

module attributes {stable_mosaic.version = 11 : i64} {
  func.func @kernel(%arg0: i32, %arg1: memref<784x576xbf16, #tpu.memory_space<vmem>>, %arg2: memref<576x128xbf16, #tpu.memory_space<vmem>>, %arg3: memref<1x128xf32, #tpu.memory_space<vmem>>, %arg4: memref<784x128xbf16, #tpu.memory_space<vmem>>) attributes {dimension_semantics = [#tpu.dimension_semantics<parallel>], iteration_bounds = array<i64: 1>, scalar_prefetch = 0 : i64, scratch_operands = 0 : i64, tpu.core_type = #tpu.core_type<tc>, window_params = [{transform_indices = @transform_0, window_bounds = array<i64: 784, 576>}, {pipeline_mode = #tpu.pipeline_mode<synchronous>, transform_indices = @transform_1, window_bounds = array<i64: 576, 128>}, {pipeline_mode = #tpu.pipeline_mode<synchronous>, transform_indices = @transform_2, window_bounds = array<i64: 1, 128>}, {transform_indices = @transform_3, window_bounds = array<i64: 784, 128>}]} {
    %c0 = arith.constant 0 : index
    %c0_0 = arith.constant 0 : index
    %0 = vector.load %arg1[%c0, %c0_0] : memref<784x576xbf16, #tpu.memory_space<vmem>>, vector<784x576xbf16>
    %c0_1 = arith.constant 0 : index
    %c0_2 = arith.constant 0 : index
    %1 = vector.load %arg2[%c0_1, %c0_2] : memref<576x128xbf16, #tpu.memory_space<vmem>>, vector<576x128xbf16>
    %cst = arith.constant dense<0.000000e+00> : vector<784x128xf32>
    %2 = tpu.matmul %0, %1, %cst {dimension_numbers = #tpu.dot_dimension_numbers<[1], [0], [0], [1], [0, 0, 1, 1], [], []>} : vector<784x576xbf16>, vector<576x128xbf16>, vector<784x128xf32> -> vector<784x128xf32>
    %c0_3 = arith.constant 0 : index
    %c0_4 = arith.constant 0 : index
    %3 = vector.load %arg3[%c0_3, %c0_4] : memref<1x128xf32, #tpu.memory_space<vmem>>, vector<1x128xf32>
    %4 = vector.broadcast %3 : vector<1x128xf32> to vector<784x128xf32>
    %5 = arith.addf %2, %4 : vector<784x128xf32>
    %cst_5 = arith.constant 0.000000e+00 : f32
    %6 = vector.broadcast %cst_5 : f32 to vector<784x128xf32>
    %7 = arith.maximumf %5, %6 : vector<784x128xf32>
    %8 = arith.truncf %7 : vector<784x128xf32> to vector<784x128xbf16>
    %c0_6 = arith.constant 0 : index
    %c0_7 = arith.constant 0 : index
    %9 = vector.load %arg4[%c0_6, %c0_7] : memref<784x128xbf16, #tpu.memory_space<vmem>>, vector<784x128xbf16>
    tpu.vector_store %arg4[%c0_6, %c0_7], %8 {strides = array<i32>} : memref<784x128xbf16, #tpu.memory_space<vmem>>, vector<784x128xbf16>,
    return
  }
  func.func @transform_0(%arg0: i32) -> (i32, i32) {
    %c0_i32 = arith.constant 0 : i32
    %c0_i32_0 = arith.constant 0 : i32
    return %arg0, %c0_i32 : i32, i32
  }
  func.func @transform_1(%arg0: i32) -> (i32, i32) {
    %c0_i32 = arith.constant 0 : i32
    %c0_i32_0 = arith.constant 0 : i32
    %c0_i32_1 = arith.constant 0 : i32
    return %c0_i32, %c0_i32_0 : i32, i32
  }
  func.func @transform_2(%arg0: i32) -> (i32, i32) {
    %c0_i32 = arith.constant 0 : i32
    %c0_i32_0 = arith.constant 0 : i32
    %c0_i32_1 = arith.constant 0 : i32
    return %c0_i32, %c0_i32_0 : i32, i32
  }
  func.func @transform_3(%arg0: i32) -> (i32, i32) {
    %c0_i32 = arith.constant 0 : i32
    %c0_i32_0 = arith.constant 0 : i32
    return %arg0, %c0_i32 : i32, i32
  }
}

module attributes {stable_mosaic.version = 11 : i64} {
  func.func @kernel(%arg0: i32, %arg1: memref<196x1152xbf16, #tpu.memory_space<vmem>>, %arg2: memref<1152x256xbf16, #tpu.memory_space<vmem>>, %arg3: memref<1x256xf32, #tpu.memory_space<vmem>>, %arg4: memref<196x256xbf16, #tpu.memory_space<vmem>>) attributes {dimension_semantics = [#tpu.dimension_semantics<parallel>], iteration_bounds = array<i64: 1>, scalar_prefetch = 0 : i64, scratch_operands = 0 : i64, tpu.core_type = #tpu.core_type<tc>, window_params = [{transform_indices = @transform_0, window_bounds = array<i64: 196, 1152>}, {pipeline_mode = #tpu.pipeline_mode<synchronous>, transform_indices = @transform_1, window_bounds = array<i64: 1152, 256>}, {pipeline_mode = #tpu.pipeline_mode<synchronous>, transform_indices = @transform_2, window_bounds = array<i64: 1, 256>}, {transform_indices = @transform_3, window_bounds = array<i64: 196, 256>}]} {
    %c0 = arith.constant 0 : index
    %c0_0 = arith.constant 0 : index
    %0 = vector.load %arg1[%c0, %c0_0] : memref<196x1152xbf16, #tpu.memory_space<vmem>>, vector<196x1152xbf16>
    %c0_1 = arith.constant 0 : index
    %c0_2 = arith.constant 0 : index
    %1 = vector.load %arg2[%c0_1, %c0_2] : memref<1152x256xbf16, #tpu.memory_space<vmem>>, vector<1152x256xbf16>
    %cst = arith.constant dense<0.000000e+00> : vector<196x256xf32>
    %2 = tpu.matmul %0, %1, %cst {dimension_numbers = #tpu.dot_dimension_numbers<[1], [0], [0], [1], [0, 0, 1, 1], [], []>} : vector<196x1152xbf16>, vector<1152x256xbf16>, vector<196x256xf32> -> vector<196x256xf32>
    %c0_3 = arith.constant 0 : index
    %c0_4 = arith.constant 0 : index
    %3 = vector.load %arg3[%c0_3, %c0_4] : memref<1x256xf32, #tpu.memory_space<vmem>>, vector<1x256xf32>
    %4 = vector.broadcast %3 : vector<1x256xf32> to vector<196x256xf32>
    %5 = arith.addf %2, %4 : vector<196x256xf32>
    %cst_5 = arith.constant 0.000000e+00 : f32
    %6 = vector.broadcast %cst_5 : f32 to vector<196x256xf32>
    %7 = arith.maximumf %5, %6 : vector<196x256xf32>
    %8 = arith.truncf %7 : vector<196x256xf32> to vector<196x256xbf16>
    %c0_6 = arith.constant 0 : index
    %c0_7 = arith.constant 0 : index
    %9 = vector.load %arg4[%c0_6, %c0_7] : memref<196x256xbf16, #tpu.memory_space<vmem>>, vector<196x256xbf16>
    tpu.vector_store %arg4[%c0_6, %c0_7], %8 {strides = array<i32>} : memref<196x256xbf16, #tpu.memory_space<vmem>>, vector<196x256xbf16>,
    return
  }
  func.func @transform_0(%arg0: i32) -> (i32, i32) {
    %c0_i32 = arith.constant 0 : i32
    %c0_i32_0 = arith.constant 0 : i32
    return %arg0, %c0_i32 : i32, i32
  }
  func.func @transform_1(%arg0: i32) -> (i32, i32) {
    %c0_i32 = arith.constant 0 : i32
    %c0_i32_0 = arith.constant 0 : i32
    %c0_i32_1 = arith.constant 0 : i32
    return %c0_i32, %c0_i32_0 : i32, i32
  }
  func.func @transform_2(%arg0: i32) -> (i32, i32) {
    %c0_i32 = arith.constant 0 : i32
    %c0_i32_0 = arith.constant 0 : i32
    %c0_i32_1 = arith.constant 0 : i32
    return %c0_i32, %c0_i32_0 : i32, i32
  }
  func.func @transform_3(%arg0: i32) -> (i32, i32) {
    %c0_i32 = arith.constant 0 : i32
    %c0_i32_0 = arith.constant 0 : i32
    return %arg0, %c0_i32 : i32, i32
  }
}

module attributes {stable_mosaic.version = 11 : i64} {
  func.func @kernel(%arg0: i32, %arg1: memref<64x2304xbf16, #tpu.memory_space<vmem>>, %arg2: memref<2304x512xbf16, #tpu.memory_space<vmem>>, %arg3: memref<1x512xf32, #tpu.memory_space<vmem>>, %arg4: memref<64x512xbf16, #tpu.memory_space<vmem>>) attributes {dimension_semantics = [#tpu.dimension_semantics<parallel>], iteration_bounds = array<i64: 1>, scalar_prefetch = 0 : i64, scratch_operands = 0 : i64, tpu.core_type = #tpu.core_type<tc>, window_params = [{transform_indices = @transform_0, window_bounds = array<i64: 64, 2304>}, {pipeline_mode = #tpu.pipeline_mode<synchronous>, transform_indices = @transform_1, window_bounds = array<i64: 2304, 512>}, {pipeline_mode = #tpu.pipeline_mode<synchronous>, transform_indices = @transform_2, window_bounds = array<i64: 1, 512>}, {transform_indices = @transform_3, window_bounds = array<i64: 64, 512>}]} {
    %c0 = arith.constant 0 : index
    %c0_0 = arith.constant 0 : index
    %0 = vector.load %arg1[%c0, %c0_0] : memref<64x2304xbf16, #tpu.memory_space<vmem>>, vector<64x2304xbf16>
    %c0_1 = arith.constant 0 : index
    %c0_2 = arith.constant 0 : index
    %1 = vector.load %arg2[%c0_1, %c0_2] : memref<2304x512xbf16, #tpu.memory_space<vmem>>, vector<2304x512xbf16>
    %cst = arith.constant dense<0.000000e+00> : vector<64x512xf32>
    %2 = tpu.matmul %0, %1, %cst {dimension_numbers = #tpu.dot_dimension_numbers<[1], [0], [0], [1], [0, 0, 1, 1], [], []>} : vector<64x2304xbf16>, vector<2304x512xbf16>, vector<64x512xf32> -> vector<64x512xf32>
    %c0_3 = arith.constant 0 : index
    %c0_4 = arith.constant 0 : index
    %3 = vector.load %arg3[%c0_3, %c0_4] : memref<1x512xf32, #tpu.memory_space<vmem>>, vector<1x512xf32>
    %4 = vector.broadcast %3 : vector<1x512xf32> to vector<64x512xf32>
    %5 = arith.addf %2, %4 : vector<64x512xf32>
    %cst_5 = arith.constant 0.000000e+00 : f32
    %6 = vector.broadcast %cst_5 : f32 to vector<64x512xf32>
    %7 = arith.maximumf %5, %6 : vector<64x512xf32>
    %8 = arith.truncf %7 : vector<64x512xf32> to vector<64x512xbf16>
    %c0_6 = arith.constant 0 : index
    %c0_7 = arith.constant 0 : index
    %9 = vector.load %arg4[%c0_6, %c0_7] : memref<64x512xbf16, #tpu.memory_space<vmem>>, vector<64x512xbf16>
    tpu.vector_store %arg4[%c0_6, %c0_7], %8 {strides = array<i32>} : memref<64x512xbf16, #tpu.memory_space<vmem>>, vector<64x512xbf16>,
    return
  }
  func.func @transform_0(%arg0: i32) -> (i32, i32) {
    %c0_i32 = arith.constant 0 : i32
    %c0_i32_0 = arith.constant 0 : i32
    return %arg0, %c0_i32 : i32, i32
  }
  func.func @transform_1(%arg0: i32) -> (i32, i32) {
    %c0_i32 = arith.constant 0 : i32
    %c0_i32_0 = arith.constant 0 : i32
    %c0_i32_1 = arith.constant 0 : i32
    return %c0_i32, %c0_i32_0 : i32, i32
  }
  func.func @transform_2(%arg0: i32) -> (i32, i32) {
    %c0_i32 = arith.constant 0 : i32
    %c0_i32_0 = arith.constant 0 : i32
    %c0_i32_1 = arith.constant 0 : i32
    return %c0_i32, %c0_i32_0 : i32, i32
  }
  func.func @transform_3(%arg0: i32) -> (i32, i32) {
    %c0_i32 = arith.constant 0 : i32
    %c0_i32_0 = arith.constant 0 : i32
    return %arg0, %c0_i32 : i32, i32
  }
}

module attributes {stable_mosaic.version = 11 : i64} {
  func.func @kernel(%arg0: i32, %arg1: memref<4x16x512xbf16, #tpu.memory_space<vmem>>, %arg2: memref<1x512xf32, #tpu.memory_space<vmem>>, %arg3: memref<1x512xf32, #tpu.memory_space<vmem>>, %arg4: memref<4x512xf32, #tpu.memory_space<vmem>>) attributes {dimension_semantics = [#tpu.dimension_semantics<parallel>], iteration_bounds = array<i64: 1>, scalar_prefetch = 0 : i64, scratch_operands = 0 : i64, tpu.core_type = #tpu.core_type<tc>, window_params = [{transform_indices = @transform_0, window_bounds = array<i64: 4, 16, 512>}, {pipeline_mode = #tpu.pipeline_mode<synchronous>, transform_indices = @transform_1, window_bounds = array<i64: 1, 512>}, {pipeline_mode = #tpu.pipeline_mode<synchronous>, transform_indices = @transform_2, window_bounds = array<i64: 1, 512>}, {transform_indices = @transform_3, window_bounds = array<i64: 4, 512>}]} {
    %c0 = arith.constant 0 : index
    %c0_0 = arith.constant 0 : index
    %c0_1 = arith.constant 0 : index
    %0 = vector.load %arg1[%c0, %c0_0, %c0_1] : memref<4x16x512xbf16, #tpu.memory_space<vmem>>, vector<4x16x512xbf16>
    %1 = arith.extf %0 : vector<4x16x512xbf16> to vector<4x16x512xf32>
    %cst = arith.constant dense<0.000000e+00> : vector<4x512xf32>
    %2 = vector.multi_reduction <add>, %1, %cst [1] : vector<4x16x512xf32> to vector<4x512xf32>
    %cst_2 = arith.constant 1.600000e+01 : f32
    %3 = vector.broadcast %cst_2 : f32 to vector<4x512xf32>
    %4 = arith.divf %2, %3 : vector<4x512xf32>
    %c0_3 = arith.constant 0 : index
    %c0_4 = arith.constant 0 : index
    %5 = vector.load %arg2[%c0_3, %c0_4] : memref<1x512xf32, #tpu.memory_space<vmem>>, vector<1x512xf32>
    %6 = vector.broadcast %5 : vector<1x512xf32> to vector<4x512xf32>
    %7 = arith.mulf %4, %6 : vector<4x512xf32>
    %c0_5 = arith.constant 0 : index
    %c0_6 = arith.constant 0 : index
    %8 = vector.load %arg3[%c0_5, %c0_6] : memref<1x512xf32, #tpu.memory_space<vmem>>, vector<1x512xf32>
    %9 = vector.broadcast %8 : vector<1x512xf32> to vector<4x512xf32>
    %10 = arith.addf %7, %9 : vector<4x512xf32>
    %c0_7 = arith.constant 0 : index
    %c0_8 = arith.constant 0 : index
    %11 = vector.load %arg4[%c0_7, %c0_8] : memref<4x512xf32, #tpu.memory_space<vmem>>, vector<4x512xf32>
    tpu.vector_store %arg4[%c0_7, %c0_8], %10 {strides = array<i32>} : memref<4x512xf32, #tpu.memory_space<vmem>>, vector<4x512xf32>,
    return
  }
  func.func @transform_0(%arg0: i32) -> (i32, i32, i32) {
    %c0_i32 = arith.constant 0 : i32
    %c0_i32_0 = arith.constant 0 : i32
    %c0_i32_1 = arith.constant 0 : i32
    return %arg0, %c0_i32, %c0_i32_0 : i32, i32, i32
  }
  func.func @transform_1(%arg0: i32) -> (i32, i32) {
    %c0_i32 = arith.constant 0 : i32
    %c0_i32_0 = arith.constant 0 : i32
    %c0_i32_1 = arith.constant 0 : i32
    return %c0_i32, %c0_i32_0 : i32, i32
  }
  func.func @transform_2(%arg0: i32) -> (i32, i32) {
    %c0_i32 = arith.constant 0 : i32
    %c0_i32_0 = arith.constant 0 : i32
    %c0_i32_1 = arith.constant 0 : i32
    return %c0_i32, %c0_i32_0 : i32, i32
  }
  func.func @transform_3(%arg0: i32) -> (i32, i32) {
    %c0_i32 = arith.constant 0 : i32
    %c0_i32_0 = arith.constant 0 : i32
    return %arg0, %c0_i32 : i32, i32
  }
}

module attributes {stable_mosaic.version = 11 : i64} {
  func.func @kernel(%arg0: i32, %arg1: memref<4x49x256xbf16, #tpu.memory_space<vmem>>, %arg2: memref<1x256xf32, #tpu.memory_space<vmem>>, %arg3: memref<1x256xf32, #tpu.memory_space<vmem>>, %arg4: memref<4x256xf32, #tpu.memory_space<vmem>>) attributes {dimension_semantics = [#tpu.dimension_semantics<parallel>], iteration_bounds = array<i64: 1>, scalar_prefetch = 0 : i64, scratch_operands = 0 : i64, tpu.core_type = #tpu.core_type<tc>, window_params = [{transform_indices = @transform_0, window_bounds = array<i64: 4, 49, 256>}, {pipeline_mode = #tpu.pipeline_mode<synchronous>, transform_indices = @transform_1, window_bounds = array<i64: 1, 256>}, {pipeline_mode = #tpu.pipeline_mode<synchronous>, transform_indices = @transform_2, window_bounds = array<i64: 1, 256>}, {transform_indices = @transform_3, window_bounds = array<i64: 4, 256>}]} {
    %c0 = arith.constant 0 : index
    %c0_0 = arith.constant 0 : index
    %c0_1 = arith.constant 0 : index
    %0 = vector.load %arg1[%c0, %c0_0, %c0_1] : memref<4x49x256xbf16, #tpu.memory_space<vmem>>, vector<4x49x256xbf16>
    %1 = arith.extf %0 : vector<4x49x256xbf16> to vector<4x49x256xf32>
    %cst = arith.constant dense<0.000000e+00> : vector<4x256xf32>
    %2 = vector.multi_reduction <add>, %1, %cst [1] : vector<4x49x256xf32> to vector<4x256xf32>
    %cst_2 = arith.constant 4.900000e+01 : f32
    %3 = vector.broadcast %cst_2 : f32 to vector<4x256xf32>
    %4 = arith.divf %2, %3 : vector<4x256xf32>
    %c0_3 = arith.constant 0 : index
    %c0_4 = arith.constant 0 : index
    %5 = vector.load %arg2[%c0_3, %c0_4] : memref<1x256xf32, #tpu.memory_space<vmem>>, vector<1x256xf32>
    %6 = vector.broadcast %5 : vector<1x256xf32> to vector<4x256xf32>
    %7 = arith.mulf %4, %6 : vector<4x256xf32>
    %c0_5 = arith.constant 0 : index
    %c0_6 = arith.constant 0 : index
    %8 = vector.load %arg3[%c0_5, %c0_6] : memref<1x256xf32, #tpu.memory_space<vmem>>, vector<1x256xf32>
    %9 = vector.broadcast %8 : vector<1x256xf32> to vector<4x256xf32>
    %10 = arith.addf %7, %9 : vector<4x256xf32>
    %c0_7 = arith.constant 0 : index
    %c0_8 = arith.constant 0 : index
    %11 = vector.load %arg4[%c0_7, %c0_8] : memref<4x256xf32, #tpu.memory_space<vmem>>, vector<4x256xf32>
    tpu.vector_store %arg4[%c0_7, %c0_8], %10 {strides = array<i32>} : memref<4x256xf32, #tpu.memory_space<vmem>>, vector<4x256xf32>,
    return
  }
  func.func @transform_0(%arg0: i32) -> (i32, i32, i32) {
    %c0_i32 = arith.constant 0 : i32
    %c0_i32_0 = arith.constant 0 : i32
    %c0_i32_1 = arith.constant 0 : i32
    return %arg0, %c0_i32, %c0_i32_0 : i32, i32, i32
  }
  func.func @transform_1(%arg0: i32) -> (i32, i32) {
    %c0_i32 = arith.constant 0 : i32
    %c0_i32_0 = arith.constant 0 : i32
    %c0_i32_1 = arith.constant 0 : i32
    return %c0_i32, %c0_i32_0 : i32, i32
  }
  func.func @transform_2(%arg0: i32) -> (i32, i32) {
    %c0_i32 = arith.constant 0 : i32
    %c0_i32_0 = arith.constant 0 : i32
    %c0_i32_1 = arith.constant 0 : i32
    return %c0_i32, %c0_i32_0 : i32, i32
  }
  func.func @transform_3(%arg0: i32) -> (i32, i32) {
    %c0_i32 = arith.constant 0 : i32
    %c0_i32_0 = arith.constant 0 : i32
    return %arg0, %c0_i32 : i32, i32
  }
}

module attributes {stable_mosaic.version = 11 : i64} {
  func.func @kernel(%arg0: i32, %arg1: memref<4x196x128xbf16, #tpu.memory_space<vmem>>, %arg2: memref<1x128xf32, #tpu.memory_space<vmem>>, %arg3: memref<1x128xf32, #tpu.memory_space<vmem>>, %arg4: memref<4x128xf32, #tpu.memory_space<vmem>>) attributes {dimension_semantics = [#tpu.dimension_semantics<parallel>], iteration_bounds = array<i64: 1>, scalar_prefetch = 0 : i64, scratch_operands = 0 : i64, tpu.core_type = #tpu.core_type<tc>, window_params = [{transform_indices = @transform_0, window_bounds = array<i64: 4, 196, 128>}, {pipeline_mode = #tpu.pipeline_mode<synchronous>, transform_indices = @transform_1, window_bounds = array<i64: 1, 128>}, {pipeline_mode = #tpu.pipeline_mode<synchronous>, transform_indices = @transform_2, window_bounds = array<i64: 1, 128>}, {transform_indices = @transform_3, window_bounds = array<i64: 4, 128>}]} {
    %c0 = arith.constant 0 : index
    %c0_0 = arith.constant 0 : index
    %c0_1 = arith.constant 0 : index
    %0 = vector.load %arg1[%c0, %c0_0, %c0_1] : memref<4x196x128xbf16, #tpu.memory_space<vmem>>, vector<4x196x128xbf16>
    %1 = arith.extf %0 : vector<4x196x128xbf16> to vector<4x196x128xf32>
    %cst = arith.constant dense<0.000000e+00> : vector<4x128xf32>
    %2 = vector.multi_reduction <add>, %1, %cst [1] : vector<4x196x128xf32> to vector<4x128xf32>
    %cst_2 = arith.constant 1.960000e+02 : f32
    %3 = vector.broadcast %cst_2 : f32 to vector<4x128xf32>
    %4 = arith.divf %2, %3 : vector<4x128xf32>
    %c0_3 = arith.constant 0 : index
    %c0_4 = arith.constant 0 : index
    %5 = vector.load %arg2[%c0_3, %c0_4] : memref<1x128xf32, #tpu.memory_space<vmem>>, vector<1x128xf32>
    %6 = vector.broadcast %5 : vector<1x128xf32> to vector<4x128xf32>
    %7 = arith.mulf %4, %6 : vector<4x128xf32>
    %c0_5 = arith.constant 0 : index
    %c0_6 = arith.constant 0 : index
    %8 = vector.load %arg3[%c0_5, %c0_6] : memref<1x128xf32, #tpu.memory_space<vmem>>, vector<1x128xf32>
    %9 = vector.broadcast %8 : vector<1x128xf32> to vector<4x128xf32>
    %10 = arith.addf %7, %9 : vector<4x128xf32>
    %c0_7 = arith.constant 0 : index
    %c0_8 = arith.constant 0 : index
    %11 = vector.load %arg4[%c0_7, %c0_8] : memref<4x128xf32, #tpu.memory_space<vmem>>, vector<4x128xf32>
    tpu.vector_store %arg4[%c0_7, %c0_8], %10 {strides = array<i32>} : memref<4x128xf32, #tpu.memory_space<vmem>>, vector<4x128xf32>,
    return
  }
  func.func @transform_0(%arg0: i32) -> (i32, i32, i32) {
    %c0_i32 = arith.constant 0 : i32
    %c0_i32_0 = arith.constant 0 : i32
    %c0_i32_1 = arith.constant 0 : i32
    return %arg0, %c0_i32, %c0_i32_0 : i32, i32, i32
  }
  func.func @transform_1(%arg0: i32) -> (i32, i32) {
    %c0_i32 = arith.constant 0 : i32
    %c0_i32_0 = arith.constant 0 : i32
    %c0_i32_1 = arith.constant 0 : i32
    return %c0_i32, %c0_i32_0 : i32, i32
  }
  func.func @transform_2(%arg0: i32) -> (i32, i32) {
    %c0_i32 = arith.constant 0 : i32
    %c0_i32_0 = arith.constant 0 : i32
    %c0_i32_1 = arith.constant 0 : i32
    return %c0_i32, %c0_i32_0 : i32, i32
  }
  func.func @transform_3(%arg0: i32) -> (i32, i32) {
    %c0_i32 = arith.constant 0 : i32
    %c0_i32_0 = arith.constant 0 : i32
    return %arg0, %c0_i32 : i32, i32
  }
}

module attributes {stable_mosaic.version = 11 : i64} {
  func.func @kernel(%arg0: i32, %arg1: memref<4x784x64xbf16, #tpu.memory_space<vmem>>, %arg2: memref<1x64xf32, #tpu.memory_space<vmem>>, %arg3: memref<1x64xf32, #tpu.memory_space<vmem>>, %arg4: memref<4x64xf32, #tpu.memory_space<vmem>>) attributes {dimension_semantics = [#tpu.dimension_semantics<parallel>], iteration_bounds = array<i64: 1>, scalar_prefetch = 0 : i64, scratch_operands = 0 : i64, tpu.core_type = #tpu.core_type<tc>, window_params = [{transform_indices = @transform_0, window_bounds = array<i64: 4, 784, 64>}, {pipeline_mode = #tpu.pipeline_mode<synchronous>, transform_indices = @transform_1, window_bounds = array<i64: 1, 64>}, {pipeline_mode = #tpu.pipeline_mode<synchronous>, transform_indices = @transform_2, window_bounds = array<i64: 1, 64>}, {transform_indices = @transform_3, window_bounds = array<i64: 4, 64>}]} {
    %c0 = arith.constant 0 : index
    %c0_0 = arith.constant 0 : index
    %c0_1 = arith.constant 0 : index
    %0 = vector.load %arg1[%c0, %c0_0, %c0_1] : memref<4x784x64xbf16, #tpu.memory_space<vmem>>, vector<4x784x64xbf16>
    %1 = arith.extf %0 : vector<4x784x64xbf16> to vector<4x784x64xf32>
    %cst = arith.constant dense<0.000000e+00> : vector<4x64xf32>
    %2 = vector.multi_reduction <add>, %1, %cst [1] : vector<4x784x64xf32> to vector<4x64xf32>
    %cst_2 = arith.constant 7.840000e+02 : f32
    %3 = vector.broadcast %cst_2 : f32 to vector<4x64xf32>
    %4 = arith.divf %2, %3 : vector<4x64xf32>
    %c0_3 = arith.constant 0 : index
    %c0_4 = arith.constant 0 : index
    %5 = vector.load %arg2[%c0_3, %c0_4] : memref<1x64xf32, #tpu.memory_space<vmem>>, vector<1x64xf32>
    %6 = vector.broadcast %5 : vector<1x64xf32> to vector<4x64xf32>
    %7 = arith.mulf %4, %6 : vector<4x64xf32>
    %c0_5 = arith.constant 0 : index
    %c0_6 = arith.constant 0 : index
    %8 = vector.load %arg3[%c0_5, %c0_6] : memref<1x64xf32, #tpu.memory_space<vmem>>, vector<1x64xf32>
    %9 = vector.broadcast %8 : vector<1x64xf32> to vector<4x64xf32>
    %10 = arith.addf %7, %9 : vector<4x64xf32>
    %c0_7 = arith.constant 0 : index
    %c0_8 = arith.constant 0 : index
    %11 = vector.load %arg4[%c0_7, %c0_8] : memref<4x64xf32, #tpu.memory_space<vmem>>, vector<4x64xf32>
    tpu.vector_store %arg4[%c0_7, %c0_8], %10 {strides = array<i32>} : memref<4x64xf32, #tpu.memory_space<vmem>>, vector<4x64xf32>,
    return
  }
  func.func @transform_0(%arg0: i32) -> (i32, i32, i32) {
    %c0_i32 = arith.constant 0 : i32
    %c0_i32_0 = arith.constant 0 : i32
    %c0_i32_1 = arith.constant 0 : i32
    return %arg0, %c0_i32, %c0_i32_0 : i32, i32, i32
  }
  func.func @transform_1(%arg0: i32) -> (i32, i32) {
    %c0_i32 = arith.constant 0 : i32
    %c0_i32_0 = arith.constant 0 : i32
    %c0_i32_1 = arith.constant 0 : i32
    return %c0_i32, %c0_i32_0 : i32, i32
  }
  func.func @transform_2(%arg0: i32) -> (i32, i32) {
    %c0_i32 = arith.constant 0 : i32
    %c0_i32_0 = arith.constant 0 : i32
    %c0_i32_1 = arith.constant 0 : i32
    return %c0_i32, %c0_i32_0 : i32, i32
  }
  func.func @transform_3(%arg0: i32) -> (i32, i32) {
    %c0_i32 = arith.constant 0 : i32
    %c0_i32_0 = arith.constant 0 : i32
    return %arg0, %c0_i32 : i32, i32
  }
}

module attributes {stable_mosaic.version = 11 : i64} {
  func.func @kernel(%arg0: i32, %arg1: memref<1280x15xbf16, #tpu.memory_space<vmem>>, %arg2: memref<15x4xbf16, #tpu.memory_space<vmem>>, %arg3: memref<1x4xf32, #tpu.memory_space<vmem>>, %arg4: memref<1280x4xbf16, #tpu.memory_space<vmem>>) attributes {dimension_semantics = [#tpu.dimension_semantics<parallel>], iteration_bounds = array<i64: 1>, scalar_prefetch = 0 : i64, scratch_operands = 0 : i64, tpu.core_type = #tpu.core_type<tc>, window_params = [{transform_indices = @transform_0, window_bounds = array<i64: 1280, 15>}, {pipeline_mode = #tpu.pipeline_mode<synchronous>, transform_indices = @transform_1, window_bounds = array<i64: 15, 4>}, {pipeline_mode = #tpu.pipeline_mode<synchronous>, transform_indices = @transform_2, window_bounds = array<i64: 1, 4>}, {transform_indices = @transform_3, window_bounds = array<i64: 1280, 4>}]} {
    %c0 = arith.constant 0 : index
    %c0_0 = arith.constant 0 : index
    %0 = vector.load %arg1[%c0, %c0_0] : memref<1280x15xbf16, #tpu.memory_space<vmem>>, vector<1280x15xbf16>
    %c0_1 = arith.constant 0 : index
    %c0_2 = arith.constant 0 : index
    %1 = vector.load %arg2[%c0_1, %c0_2] : memref<15x4xbf16, #tpu.memory_space<vmem>>, vector<15x4xbf16>
    %cst = arith.constant dense<0.000000e+00> : vector<1280x4xf32>
    %2 = tpu.matmul %0, %1, %cst {dimension_numbers = #tpu.dot_dimension_numbers<[1], [0], [0], [1], [0, 0, 1, 1], [], []>} : vector<1280x15xbf16>, vector<15x4xbf16>, vector<1280x4xf32> -> vector<1280x4xf32>
    %c0_3 = arith.constant 0 : index
    %c0_4 = arith.constant 0 : index
    %3 = vector.load %arg3[%c0_3, %c0_4] : memref<1x4xf32, #tpu.memory_space<vmem>>, vector<1x4xf32>
    %4 = vector.broadcast %3 : vector<1x4xf32> to vector<1280x4xf32>
    %5 = arith.addf %2, %4 : vector<1280x4xf32>
    %6 = arith.truncf %5 : vector<1280x4xf32> to vector<1280x4xbf16>
    %c0_5 = arith.constant 0 : index
    %c0_6 = arith.constant 0 : index
    %7 = vector.load %arg4[%c0_5, %c0_6] : memref<1280x4xbf16, #tpu.memory_space<vmem>>, vector<1280x4xbf16>
    tpu.vector_store %arg4[%c0_5, %c0_6], %6 {strides = array<i32>} : memref<1280x4xbf16, #tpu.memory_space<vmem>>, vector<1280x4xbf16>,
    return
  }
  func.func @transform_0(%arg0: i32) -> (i32, i32) {
    %c0_i32 = arith.constant 0 : i32
    %c0_i32_0 = arith.constant 0 : i32
    return %arg0, %c0_i32 : i32, i32
  }
  func.func @transform_1(%arg0: i32) -> (i32, i32) {
    %c0_i32 = arith.constant 0 : i32
    %c0_i32_0 = arith.constant 0 : i32
    %c0_i32_1 = arith.constant 0 : i32
    return %c0_i32, %c0_i32_0 : i32, i32
  }
  func.func @transform_2(%arg0: i32) -> (i32, i32) {
    %c0_i32 = arith.constant 0 : i32
    %c0_i32_0 = arith.constant 0 : i32
    %c0_i32_1 = arith.constant 0 : i32
    return %c0_i32, %c0_i32_0 : i32, i32
  }
  func.func @transform_3(%arg0: i32) -> (i32, i32) {
    %c0_i32 = arith.constant 0 : i32
    %c0_i32_0 = arith.constant 0 : i32
    return %arg0, %c0_i32 : i32, i32
  }
}

module attributes {stable_mosaic.version = 11 : i64} {
  func.func @kernel(%arg0: i32, %arg1: memref<424x15x4xbf16, #tpu.memory_space<vmem>>, %arg2: memref<1x4xf32, #tpu.memory_space<vmem>>, %arg3: memref<1x4xf32, #tpu.memory_space<vmem>>, %arg4: memref<424x4xf32, #tpu.memory_space<vmem>>) attributes {dimension_semantics = [#tpu.dimension_semantics<parallel>], iteration_bounds = array<i64: 1>, scalar_prefetch = 0 : i64, scratch_operands = 0 : i64, tpu.core_type = #tpu.core_type<tc>, window_params = [{transform_indices = @transform_0, window_bounds = array<i64: 424, 15, 4>}, {pipeline_mode = #tpu.pipeline_mode<synchronous>, transform_indices = @transform_1, window_bounds = array<i64: 1, 4>}, {pipeline_mode = #tpu.pipeline_mode<synchronous>, transform_indices = @transform_2, window_bounds = array<i64: 1, 4>}, {transform_indices = @transform_3, window_bounds = array<i64: 424, 4>}]} {
    %c0 = arith.constant 0 : index
    %c0_0 = arith.constant 0 : index
    %c0_1 = arith.constant 0 : index
    %0 = vector.load %arg1[%c0, %c0_0, %c0_1] : memref<424x15x4xbf16, #tpu.memory_space<vmem>>, vector<424x15x4xbf16>
    %1 = arith.extf %0 : vector<424x15x4xbf16> to vector<424x15x4xf32>
    %cst = arith.constant dense<0.000000e+00> : vector<424x4xf32>
    %2 = vector.multi_reduction <add>, %1, %cst [1] : vector<424x15x4xf32> to vector<424x4xf32>
    %cst_2 = arith.constant 1.500000e+01 : f32
    %3 = vector.broadcast %cst_2 : f32 to vector<424x4xf32>
    %4 = arith.divf %2, %3 : vector<424x4xf32>
    %cst_3 = arith.constant 0.000000e+00 : f32
    %5 = vector.broadcast %cst_3 : f32 to vector<424x4xf32>
    %6 = arith.maximumf %4, %5 : vector<424x4xf32>
    %c0_4 = arith.constant 0 : index
    %c0_5 = arith.constant 0 : index
    %7 = vector.load %arg2[%c0_4, %c0_5] : memref<1x4xf32, #tpu.memory_space<vmem>>, vector<1x4xf32>
    %8 = vector.broadcast %7 : vector<1x4xf32> to vector<424x4xf32>
    %9 = arith.mulf %6, %8 : vector<424x4xf32>
    %c0_6 = arith.constant 0 : index
    %c0_7 = arith.constant 0 : index
    %10 = vector.load %arg3[%c0_6, %c0_7] : memref<1x4xf32, #tpu.memory_space<vmem>>, vector<1x4xf32>
    %11 = vector.broadcast %10 : vector<1x4xf32> to vector<424x4xf32>
    %12 = arith.addf %9, %11 : vector<424x4xf32>
    %c0_8 = arith.constant 0 : index
    %c0_9 = arith.constant 0 : index
    %13 = vector.load %arg4[%c0_8, %c0_9] : memref<424x4xf32, #tpu.memory_space<vmem>>, vector<424x4xf32>
    tpu.vector_store %arg4[%c0_8, %c0_9], %12 {strides = array<i32>} : memref<424x4xf32, #tpu.memory_space<vmem>>, vector<424x4xf32>,
    return
  }
  func.func @transform_0(%arg0: i32) -> (i32, i32, i32) {
    %c0_i32 = arith.constant 0 : i32
    %c0_i32_0 = arith.constant 0 : i32
    %c0_i32_1 = arith.constant 0 : i32
    return %arg0, %c0_i32, %c0_i32_0 : i32, i32, i32
  }
  func.func @transform_1(%arg0: i32) -> (i32, i32) {
    %c0_i32 = arith.constant 0 : i32
    %c0_i32_0 = arith.constant 0 : i32
    %c0_i32_1 = arith.constant 0 : i32
    return %c0_i32, %c0_i32_0 : i32, i32
  }
  func.func @transform_2(%arg0: i32) -> (i32, i32) {
    %c0_i32 = arith.constant 0 : i32
    %c0_i32_0 = arith.constant 0 : i32
    %c0_i32_1 = arith.constant 0 : i32
    return %c0_i32, %c0_i32_0 : i32, i32
  }
  func.func @transform_3(%arg0: i32) -> (i32, i32) {
    %c0_i32 = arith.constant 0 : i32
    %c0_i32_0 = arith.constant 0 : i32
    return %arg0, %c0_i32 : i32, i32
  }
}

module attributes {stable_mosaic.version = 11 : i64} {
  func.func @kernel(%arg0: i32, %arg1: memref<140x60xbf16, #tpu.memory_space<vmem>>, %arg2: memref<60x16xbf16, #tpu.memory_space<vmem>>, %arg3: memref<1x16xf32, #tpu.memory_space<vmem>>, %arg4: memref<140x16xbf16, #tpu.memory_space<vmem>>) attributes {dimension_semantics = [#tpu.dimension_semantics<parallel>], iteration_bounds = array<i64: 1>, scalar_prefetch = 0 : i64, scratch_operands = 0 : i64, tpu.core_type = #tpu.core_type<tc>, window_params = [{transform_indices = @transform_0, window_bounds = array<i64: 140, 60>}, {pipeline_mode = #tpu.pipeline_mode<synchronous>, transform_indices = @transform_1, window_bounds = array<i64: 60, 16>}, {pipeline_mode = #tpu.pipeline_mode<synchronous>, transform_indices = @transform_2, window_bounds = array<i64: 1, 16>}, {transform_indices = @transform_3, window_bounds = array<i64: 140, 16>}]} {
    %c0 = arith.constant 0 : index
    %c0_0 = arith.constant 0 : index
    %0 = vector.load %arg1[%c0, %c0_0] : memref<140x60xbf16, #tpu.memory_space<vmem>>, vector<140x60xbf16>
    %c0_1 = arith.constant 0 : index
    %c0_2 = arith.constant 0 : index
    %1 = vector.load %arg2[%c0_1, %c0_2] : memref<60x16xbf16, #tpu.memory_space<vmem>>, vector<60x16xbf16>
    %cst = arith.constant dense<0.000000e+00> : vector<140x16xf32>
    %2 = tpu.matmul %0, %1, %cst {dimension_numbers = #tpu.dot_dimension_numbers<[1], [0], [0], [1], [0, 0, 1, 1], [], []>} : vector<140x60xbf16>, vector<60x16xbf16>, vector<140x16xf32> -> vector<140x16xf32>
    %c0_3 = arith.constant 0 : index
    %c0_4 = arith.constant 0 : index
    %3 = vector.load %arg3[%c0_3, %c0_4] : memref<1x16xf32, #tpu.memory_space<vmem>>, vector<1x16xf32>
    %4 = vector.broadcast %3 : vector<1x16xf32> to vector<140x16xf32>
    %5 = arith.addf %2, %4 : vector<140x16xf32>
    %6 = arith.truncf %5 : vector<140x16xf32> to vector<140x16xbf16>
    %c0_5 = arith.constant 0 : index
    %c0_6 = arith.constant 0 : index
    %7 = vector.load %arg4[%c0_5, %c0_6] : memref<140x16xbf16, #tpu.memory_space<vmem>>, vector<140x16xbf16>
    tpu.vector_store %arg4[%c0_5, %c0_6], %6 {strides = array<i32>} : memref<140x16xbf16, #tpu.memory_space<vmem>>, vector<140x16xbf16>,
    return
  }
  func.func @transform_0(%arg0: i32) -> (i32, i32) {
    %c0_i32 = arith.constant 0 : i32
    %c0_i32_0 = arith.constant 0 : i32
    return %arg0, %c0_i32 : i32, i32
  }
  func.func @transform_1(%arg0: i32) -> (i32, i32) {
    %c0_i32 = arith.constant 0 : i32
    %c0_i32_0 = arith.constant 0 : i32
    %c0_i32_1 = arith.constant 0 : i32
    return %c0_i32, %c0_i32_0 : i32, i32
  }
  func.func @transform_2(%arg0: i32) -> (i32, i32) {
    %c0_i32 = arith.constant 0 : i32
    %c0_i32_0 = arith.constant 0 : i32
    %c0_i32_1 = arith.constant 0 : i32
    return %c0_i32, %c0_i32_0 : i32, i32
  }
  func.func @transform_3(%arg0: i32) -> (i32, i32) {
    %c0_i32 = arith.constant 0 : i32
    %c0_i32_0 = arith.constant 0 : i32
    return %arg0, %c0_i32 : i32, i32
  }
}

module attributes {stable_mosaic.version = 11 : i64} {
  func.func @kernel(%arg0: i32, %arg1: memref<44x15x16xbf16, #tpu.memory_space<vmem>>, %arg2: memref<1x16xf32, #tpu.memory_space<vmem>>, %arg3: memref<1x16xf32, #tpu.memory_space<vmem>>, %arg4: memref<44x16xf32, #tpu.memory_space<vmem>>) attributes {dimension_semantics = [#tpu.dimension_semantics<parallel>], iteration_bounds = array<i64: 1>, scalar_prefetch = 0 : i64, scratch_operands = 0 : i64, tpu.core_type = #tpu.core_type<tc>, window_params = [{transform_indices = @transform_0, window_bounds = array<i64: 44, 15, 16>}, {pipeline_mode = #tpu.pipeline_mode<synchronous>, transform_indices = @transform_1, window_bounds = array<i64: 1, 16>}, {pipeline_mode = #tpu.pipeline_mode<synchronous>, transform_indices = @transform_2, window_bounds = array<i64: 1, 16>}, {transform_indices = @transform_3, window_bounds = array<i64: 44, 16>}]} {
    %c0 = arith.constant 0 : index
    %c0_0 = arith.constant 0 : index
    %c0_1 = arith.constant 0 : index
    %0 = vector.load %arg1[%c0, %c0_0, %c0_1] : memref<44x15x16xbf16, #tpu.memory_space<vmem>>, vector<44x15x16xbf16>
    %1 = arith.extf %0 : vector<44x15x16xbf16> to vector<44x15x16xf32>
    %cst = arith.constant dense<0.000000e+00> : vector<44x16xf32>
    %2 = vector.multi_reduction <add>, %1, %cst [1] : vector<44x15x16xf32> to vector<44x16xf32>
    %cst_2 = arith.constant 1.500000e+01 : f32
    %3 = vector.broadcast %cst_2 : f32 to vector<44x16xf32>
    %4 = arith.divf %2, %3 : vector<44x16xf32>
    %cst_3 = arith.constant 0.000000e+00 : f32
    %5 = vector.broadcast %cst_3 : f32 to vector<44x16xf32>
    %6 = arith.maximumf %4, %5 : vector<44x16xf32>
    %c0_4 = arith.constant 0 : index
    %c0_5 = arith.constant 0 : index
    %7 = vector.load %arg2[%c0_4, %c0_5] : memref<1x16xf32, #tpu.memory_space<vmem>>, vector<1x16xf32>
    %8 = vector.broadcast %7 : vector<1x16xf32> to vector<44x16xf32>
    %9 = arith.mulf %6, %8 : vector<44x16xf32>
    %c0_6 = arith.constant 0 : index
    %c0_7 = arith.constant 0 : index
    %10 = vector.load %arg3[%c0_6, %c0_7] : memref<1x16xf32, #tpu.memory_space<vmem>>, vector<1x16xf32>
    %11 = vector.broadcast %10 : vector<1x16xf32> to vector<44x16xf32>
    %12 = arith.addf %9, %11 : vector<44x16xf32>
    %c0_8 = arith.constant 0 : index
    %c0_9 = arith.constant 0 : index
    %13 = vector.load %arg4[%c0_8, %c0_9] : memref<44x16xf32, #tpu.memory_space<vmem>>, vector<44x16xf32>
    tpu.vector_store %arg4[%c0_8, %c0_9], %12 {strides = array<i32>} : memref<44x16xf32, #tpu.memory_space<vmem>>, vector<44x16xf32>,
    return
  }
  func.func @transform_0(%arg0: i32) -> (i32, i32, i32) {
    %c0_i32 = arith.constant 0 : i32
    %c0_i32_0 = arith.constant 0 : i32
    %c0_i32_1 = arith.constant 0 : i32
    return %arg0, %c0_i32, %c0_i32_0 : i32, i32, i32
  }
  func.func @transform_1(%arg0: i32) -> (i32, i32) {
    %c0_i32 = arith.constant 0 : i32
    %c0_i32_0 = arith.constant 0 : i32
    %c0_i32_1 = arith.constant 0 : i32
    return %c0_i32, %c0_i32_0 : i32, i32
  }
  func.func @transform_2(%arg0: i32) -> (i32, i32) {
    %c0_i32 = arith.constant 0 : i32
    %c0_i32_0 = arith.constant 0 : i32
    %c0_i32_1 = arith.constant 0 : i32
    return %c0_i32, %c0_i32_0 : i32, i32
  }
  func.func @transform_3(%arg0: i32) -> (i32, i32) {
    %c0_i32 = arith.constant 0 : i32
    %c0_i32_0 = arith.constant 0 : i32
    return %arg0, %c0_i32 : i32, i32
  }
}

module attributes {stable_mosaic.version = 11 : i64} {
  func.func @kernel(%arg0: i32, %arg1: memref<6x240xbf16, #tpu.memory_space<vmem>>, %arg2: memref<240x64xbf16, #tpu.memory_space<vmem>>, %arg3: memref<1x64xf32, #tpu.memory_space<vmem>>, %arg4: memref<6x64xbf16, #tpu.memory_space<vmem>>) attributes {dimension_semantics = [#tpu.dimension_semantics<parallel>], iteration_bounds = array<i64: 1>, scalar_prefetch = 0 : i64, scratch_operands = 0 : i64, tpu.core_type = #tpu.core_type<tc>, window_params = [{transform_indices = @transform_0, window_bounds = array<i64: 6, 240>}, {pipeline_mode = #tpu.pipeline_mode<synchronous>, transform_indices = @transform_1, window_bounds = array<i64: 240, 64>}, {pipeline_mode = #tpu.pipeline_mode<synchronous>, transform_indices = @transform_2, window_bounds = array<i64: 1, 64>}, {transform_indices = @transform_3, window_bounds = array<i64: 6, 64>}]} {
    %c0 = arith.constant 0 : index
    %c0_0 = arith.constant 0 : index
    %0 = vector.load %arg1[%c0, %c0_0] : memref<6x240xbf16, #tpu.memory_space<vmem>>, vector<6x240xbf16>
    %c0_1 = arith.constant 0 : index
    %c0_2 = arith.constant 0 : index
    %1 = vector.load %arg2[%c0_1, %c0_2] : memref<240x64xbf16, #tpu.memory_space<vmem>>, vector<240x64xbf16>
    %cst = arith.constant dense<0.000000e+00> : vector<6x64xf32>
    %2 = tpu.matmul %0, %1, %cst {dimension_numbers = #tpu.dot_dimension_numbers<[1], [0], [0], [1], [0, 0, 1, 1], [], []>} : vector<6x240xbf16>, vector<240x64xbf16>, vector<6x64xf32> -> vector<6x64xf32>
    %c0_3 = arith.constant 0 : index
    %c0_4 = arith.constant 0 : index
    %3 = vector.load %arg3[%c0_3, %c0_4] : memref<1x64xf32, #tpu.memory_space<vmem>>, vector<1x64xf32>
    %4 = vector.broadcast %3 : vector<1x64xf32> to vector<6x64xf32>
    %5 = arith.addf %2, %4 : vector<6x64xf32>
    %6 = arith.truncf %5 : vector<6x64xf32> to vector<6x64xbf16>
    %c0_5 = arith.constant 0 : index
    %c0_6 = arith.constant 0 : index
    %7 = vector.load %arg4[%c0_5, %c0_6] : memref<6x64xbf16, #tpu.memory_space<vmem>>, vector<6x64xbf16>
    tpu.vector_store %arg4[%c0_5, %c0_6], %6 {strides = array<i32>} : memref<6x64xbf16, #tpu.memory_space<vmem>>, vector<6x64xbf16>,
    return
  }
  func.func @transform_0(%arg0: i32) -> (i32, i32) {
    %c0_i32 = arith.constant 0 : i32
    %c0_i32_0 = arith.constant 0 : i32
    return %arg0, %c0_i32 : i32, i32
  }
  func.func @transform_1(%arg0: i32) -> (i32, i32) {
    %c0_i32 = arith.constant 0 : i32
    %c0_i32_0 = arith.constant 0 : i32
    %c0_i32_1 = arith.constant 0 : i32
    return %c0_i32, %c0_i32_0 : i32, i32
  }
  func.func @transform_2(%arg0: i32) -> (i32, i32) {
    %c0_i32 = arith.constant 0 : i32
    %c0_i32_0 = arith.constant 0 : i32
    %c0_i32_1 = arith.constant 0 : i32
    return %c0_i32, %c0_i32_0 : i32, i32
  }
  func.func @transform_3(%arg0: i32) -> (i32, i32) {
    %c0_i32 = arith.constant 0 : i32
    %c0_i32_0 = arith.constant 0 : i32
    return %arg0, %c0_i32 : i32, i32
  }
}

module attributes {stable_mosaic.version = 11 : i64} {
  func.func @kernel(%arg0: i32, %arg1: memref<2x15x64xbf16, #tpu.memory_space<vmem>>, %arg2: memref<1x64xf32, #tpu.memory_space<vmem>>, %arg3: memref<1x64xf32, #tpu.memory_space<vmem>>, %arg4: memref<2x64xf32, #tpu.memory_space<vmem>>) attributes {dimension_semantics = [#tpu.dimension_semantics<parallel>], iteration_bounds = array<i64: 1>, scalar_prefetch = 0 : i64, scratch_operands = 0 : i64, tpu.core_type = #tpu.core_type<tc>, window_params = [{transform_indices = @transform_0, window_bounds = array<i64: 2, 15, 64>}, {pipeline_mode = #tpu.pipeline_mode<synchronous>, transform_indices = @transform_1, window_bounds = array<i64: 1, 64>}, {pipeline_mode = #tpu.pipeline_mode<synchronous>, transform_indices = @transform_2, window_bounds = array<i64: 1, 64>}, {transform_indices = @transform_3, window_bounds = array<i64: 2, 64>}]} {
    %c0 = arith.constant 0 : index
    %c0_0 = arith.constant 0 : index
    %c0_1 = arith.constant 0 : index
    %0 = vector.load %arg1[%c0, %c0_0, %c0_1] : memref<2x15x64xbf16, #tpu.memory_space<vmem>>, vector<2x15x64xbf16>
    %1 = arith.extf %0 : vector<2x15x64xbf16> to vector<2x15x64xf32>
    %cst = arith.constant dense<0.000000e+00> : vector<2x64xf32>
    %2 = vector.multi_reduction <add>, %1, %cst [1] : vector<2x15x64xf32> to vector<2x64xf32>
    %cst_2 = arith.constant 1.500000e+01 : f32
    %3 = vector.broadcast %cst_2 : f32 to vector<2x64xf32>
    %4 = arith.divf %2, %3 : vector<2x64xf32>
    %cst_3 = arith.constant 0.000000e+00 : f32
    %5 = vector.broadcast %cst_3 : f32 to vector<2x64xf32>
    %6 = arith.maximumf %4, %5 : vector<2x64xf32>
    %c0_4 = arith.constant 0 : index
    %c0_5 = arith.constant 0 : index
    %7 = vector.load %arg2[%c0_4, %c0_5] : memref<1x64xf32, #tpu.memory_space<vmem>>, vector<1x64xf32>
    %8 = vector.broadcast %7 : vector<1x64xf32> to vector<2x64xf32>
    %9 = arith.mulf %6, %8 : vector<2x64xf32>
    %c0_6 = arith.constant 0 : index
    %c0_7 = arith.constant 0 : index
    %10 = vector.load %arg3[%c0_6, %c0_7] : memref<1x64xf32, #tpu.memory_space<vmem>>, vector<1x64xf32>
    %11 = vector.broadcast %10 : vector<1x64xf32> to vector<2x64xf32>
    %12 = arith.addf %9, %11 : vector<2x64xf32>
    %c0_8 = arith.constant 0 : index
    %c0_9 = arith.constant 0 : index
    %13 = vector.load %arg4[%c0_8, %c0_9] : memref<2x64xf32, #tpu.memory_space<vmem>>, vector<2x64xf32>
    tpu.vector_store %arg4[%c0_8, %c0_9], %12 {strides = array<i32>} : memref<2x64xf32, #tpu.memory_space<vmem>>, vector<2x64xf32>,
    return
  }
  func.func @transform_0(%arg0: i32) -> (i32, i32, i32) {
    %c0_i32 = arith.constant 0 : i32
    %c0_i32_0 = arith.constant 0 : i32
    %c0_i32_1 = arith.constant 0 : i32
    return %arg0, %c0_i32, %c0_i32_0 : i32, i32, i32
  }
  func.func @transform_1(%arg0: i32) -> (i32, i32) {
    %c0_i32 = arith.constant 0 : i32
    %c0_i32_0 = arith.constant 0 : i32
    %c0_i32_1 = arith.constant 0 : i32
    return %c0_i32, %c0_i32_0 : i32, i32
  }
  func.func @transform_2(%arg0: i32) -> (i32, i32) {
    %c0_i32 = arith.constant 0 : i32
    %c0_i32_0 = arith.constant 0 : i32
    %c0_i32_1 = arith.constant 0 : i32
    return %c0_i32, %c0_i32_0 : i32, i32
  }
  func.func @transform_3(%arg0: i32) -> (i32, i32) {
    %c0_i32 = arith.constant 0 : i32
    %c0_i32_0 = arith.constant 0 : i32
    return %arg0, %c0_i32 : i32, i32
  }
}

module attributes {stable_mosaic.version = 11 : i64} {
  func.func @kernel(%arg0: i32, %arg1: memref<2x1x64xf32, #tpu.memory_space<vmem>>, %arg2: memref<1x64xf32, #tpu.memory_space<vmem>>, %arg3: memref<1x64xf32, #tpu.memory_space<vmem>>, %arg4: memref<2x64xf32, #tpu.memory_space<vmem>>) attributes {dimension_semantics = [#tpu.dimension_semantics<parallel>], iteration_bounds = array<i64: 1>, scalar_prefetch = 0 : i64, scratch_operands = 0 : i64, tpu.core_type = #tpu.core_type<tc>, window_params = [{transform_indices = @transform_0, window_bounds = array<i64: 2, 1, 64>}, {pipeline_mode = #tpu.pipeline_mode<synchronous>, transform_indices = @transform_1, window_bounds = array<i64: 1, 64>}, {pipeline_mode = #tpu.pipeline_mode<synchronous>, transform_indices = @transform_2, window_bounds = array<i64: 1, 64>}, {transform_indices = @transform_3, window_bounds = array<i64: 2, 64>}]} {
    %c0 = arith.constant 0 : index
    %c0_0 = arith.constant 0 : index
    %c0_1 = arith.constant 0 : index
    %0 = vector.load %arg1[%c0, %c0_0, %c0_1] : memref<2x1x64xf32, #tpu.memory_space<vmem>>, vector<2x1x64xf32>
    %cst = arith.constant dense<0.000000e+00> : vector<2x64xf32>
    %1 = vector.multi_reduction <add>, %0, %cst [1] : vector<2x1x64xf32> to vector<2x64xf32>
    %cst_2 = arith.constant 1.000000e+00 : f32
    %2 = vector.broadcast %cst_2 : f32 to vector<2x64xf32>
    %3 = arith.divf %1, %2 : vector<2x64xf32>
    %c0_3 = arith.constant 0 : index
    %c0_4 = arith.constant 0 : index
    %4 = vector.load %arg2[%c0_3, %c0_4] : memref<1x64xf32, #tpu.memory_space<vmem>>, vector<1x64xf32>
    %5 = vector.broadcast %4 : vector<1x64xf32> to vector<2x64xf32>
    %6 = arith.mulf %3, %5 : vector<2x64xf32>
    %c0_5 = arith.constant 0 : index
    %c0_6 = arith.constant 0 : index
    %7 = vector.load %arg3[%c0_5, %c0_6] : memref<1x64xf32, #tpu.memory_space<vmem>>, vector<1x64xf32>
    %8 = vector.broadcast %7 : vector<1x64xf32> to vector<2x64xf32>
    %9 = arith.addf %6, %8 : vector<2x64xf32>
    %c0_7 = arith.constant 0 : index
    %c0_8 = arith.constant 0 : index
    %10 = vector.load %arg4[%c0_7, %c0_8] : memref<2x64xf32, #tpu.memory_space<vmem>>, vector<2x64xf32>
    tpu.vector_store %arg4[%c0_7, %c0_8], %9 {strides = array<i32>} : memref<2x64xf32, #tpu.memory_space<vmem>>, vector<2x64xf32>,
    return
  }
  func.func @transform_0(%arg0: i32) -> (i32, i32, i32) {
    %c0_i32 = arith.constant 0 : i32
    %c0_i32_0 = arith.constant 0 : i32
    %c0_i32_1 = arith.constant 0 : i32
    return %arg0, %c0_i32, %c0_i32_0 : i32, i32, i32
  }
  func.func @transform_1(%arg0: i32) -> (i32, i32) {
    %c0_i32 = arith.constant 0 : i32
    %c0_i32_0 = arith.constant 0 : i32
    %c0_i32_1 = arith.constant 0 : i32
    return %c0_i32, %c0_i32_0 : i32, i32
  }
  func.func @transform_2(%arg0: i32) -> (i32, i32) {
    %c0_i32 = arith.constant 0 : i32
    %c0_i32_0 = arith.constant 0 : i32
    %c0_i32_1 = arith.constant 0 : i32
    return %c0_i32, %c0_i32_0 : i32, i32
  }
  func.func @transform_3(%arg0: i32) -> (i32, i32) {
    %c0_i32 = arith.constant 0 : i32
    %c0_i32_0 = arith.constant 0 : i32
    return %arg0, %c0_i32 : i32, i32
  }
}

module attributes {stable_mosaic.version = 11 : i64} {
  func.func @kernel(%arg0: i32, %arg1: memref<2x64xbf16, #tpu.memory_space<vmem>>, %arg2: memref<64x5xbf16, #tpu.memory_space<vmem>>, %arg3: memref<1x5xf32, #tpu.memory_space<vmem>>, %arg4: memref<2x5xf32, #tpu.memory_space<vmem>>) attributes {dimension_semantics = [#tpu.dimension_semantics<parallel>], iteration_bounds = array<i64: 1>, scalar_prefetch = 0 : i64, scratch_operands = 0 : i64, tpu.core_type = #tpu.core_type<tc>, window_params = [{transform_indices = @transform_0, window_bounds = array<i64: 2, 64>}, {pipeline_mode = #tpu.pipeline_mode<synchronous>, transform_indices = @transform_1, window_bounds = array<i64: 64, 5>}, {pipeline_mode = #tpu.pipeline_mode<synchronous>, transform_indices = @transform_2, window_bounds = array<i64: 1, 5>}, {transform_indices = @transform_3, window_bounds = array<i64: 2, 5>}]} {
    %c0 = arith.constant 0 : index
    %c0_0 = arith.constant 0 : index
    %0 = vector.load %arg1[%c0, %c0_0] : memref<2x64xbf16, #tpu.memory_space<vmem>>, vector<2x64xbf16>
    %c0_1 = arith.constant 0 : index
    %c0_2 = arith.constant 0 : index
    %1 = vector.load %arg2[%c0_1, %c0_2] : memref<64x5xbf16, #tpu.memory_space<vmem>>, vector<64x5xbf16>
    %cst = arith.constant dense<0.000000e+00> : vector<2x5xf32>
    %2 = tpu.matmul %0, %1, %cst {dimension_numbers = #tpu.dot_dimension_numbers<[1], [0], [0], [1], [0, 0, 1, 1], [], []>} : vector<2x64xbf16>, vector<64x5xbf16>, vector<2x5xf32> -> vector<2x5xf32>
    %c0_3 = arith.constant 0 : index
    %c0_4 = arith.constant 0 : index
    %3 = vector.load %arg3[%c0_3, %c0_4] : memref<1x5xf32, #tpu.memory_space<vmem>>, vector<1x5xf32>
    %4 = vector.broadcast %3 : vector<1x5xf32> to vector<2x5xf32>
    %5 = arith.addf %2, %4 : vector<2x5xf32>
    %6 = arith.negf %5 : vector<2x5xf32>
    %7 = math.exp %6 : vector<2x5xf32>
    %cst_5 = arith.constant 1.000000e+00 : f32
    %8 = vector.broadcast %cst_5 : f32 to vector<2x5xf32>
    %9 = arith.addf %8, %7 : vector<2x5xf32>
    %10 = arith.divf %8, %9 : vector<2x5xf32>
    %c0_6 = arith.constant 0 : index
    %c0_7 = arith.constant 0 : index
    %11 = vector.load %arg4[%c0_6, %c0_7] : memref<2x5xf32, #tpu.memory_space<vmem>>, vector<2x5xf32>
    tpu.vector_store %arg4[%c0_6, %c0_7], %10 {strides = array<i32>} : memref<2x5xf32, #tpu.memory_space<vmem>>, vector<2x5xf32>,
    return
  }
  func.func @transform_0(%arg0: i32) -> (i32, i32) {
    %c0_i32 = arith.constant 0 : i32
    %c0_i32_0 = arith.constant 0 : i32
    return %arg0, %c0_i32 : i32, i32
  }
  func.func @transform_1(%arg0: i32) -> (i32, i32) {
    %c0_i32 = arith.constant 0 : i32
    %c0_i32_0 = arith.constant 0 : i32
    %c0_i32_1 = arith.constant 0 : i32
    return %c0_i32, %c0_i32_0 : i32, i32
  }
  func.func @transform_2(%arg0: i32) -> (i32, i32) {
    %c0_i32 = arith.constant 0 : i32
    %c0_i32_0 = arith.constant 0 : i32
    %c0_i32_1 = arith.constant 0 : i32
    return %c0_i32, %c0_i32_0 : i32, i32
  }
  func.func @transform_3(%arg0: i32) -> (i32, i32) {
    %c0_i32 = arith.constant 0 : i32
    %c0_i32_0 = arith.constant 0 : i32
    return %arg0, %c0_i32 : i32, i32
  }
}

module attributes {stable_mosaic.version = 11 : i64} {
  func.func @kernel(%arg0: i32, %arg1: memref<4x960xbf16, #tpu.memory_space<vmem>>, %arg2: memref<960x1176xbf16, #tpu.memory_space<vmem>>, %arg3: memref<1x1176xf32, #tpu.memory_space<vmem>>, %arg4: memref<4x1176xbf16, #tpu.memory_space<vmem>>) attributes {dimension_semantics = [#tpu.dimension_semantics<parallel>], iteration_bounds = array<i64: 1>, scalar_prefetch = 0 : i64, scratch_operands = 0 : i64, tpu.core_type = #tpu.core_type<tc>, window_params = [{transform_indices = @transform_0, window_bounds = array<i64: 4, 960>}, {pipeline_mode = #tpu.pipeline_mode<synchronous>, transform_indices = @transform_1, window_bounds = array<i64: 960, 1176>}, {pipeline_mode = #tpu.pipeline_mode<synchronous>, transform_indices = @transform_2, window_bounds = array<i64: 1, 1176>}, {transform_indices = @transform_3, window_bounds = array<i64: 4, 1176>}]} {
    %c0 = arith.constant 0 : index
    %c0_0 = arith.constant 0 : index
    %0 = vector.load %arg1[%c0, %c0_0] : memref<4x960xbf16, #tpu.memory_space<vmem>>, vector<4x960xbf16>
    %c0_1 = arith.constant 0 : index
    %c0_2 = arith.constant 0 : index
    %1 = vector.load %arg2[%c0_1, %c0_2] : memref<960x1176xbf16, #tpu.memory_space<vmem>>, vector<960x1176xbf16>
    %cst = arith.constant dense<0.000000e+00> : vector<4x1176xf32>
    %2 = tpu.matmul %0, %1, %cst {dimension_numbers = #tpu.dot_dimension_numbers<[1], [0], [0], [1], [0, 0, 1, 1], [], []>} : vector<4x960xbf16>, vector<960x1176xbf16>, vector<4x1176xf32> -> vector<4x1176xf32>
    %c0_3 = arith.constant 0 : index
    %c0_4 = arith.constant 0 : index
    %3 = vector.load %arg3[%c0_3, %c0_4] : memref<1x1176xf32, #tpu.memory_space<vmem>>, vector<1x1176xf32>
    %4 = vector.broadcast %3 : vector<1x1176xf32> to vector<4x1176xf32>
    %5 = arith.addf %2, %4 : vector<4x1176xf32>
    %6 = arith.truncf %5 : vector<4x1176xf32> to vector<4x1176xbf16>
    %c0_5 = arith.constant 0 : index
    %c0_6 = arith.constant 0 : index
    %7 = vector.load %arg4[%c0_5, %c0_6] : memref<4x1176xbf16, #tpu.memory_space<vmem>>, vector<4x1176xbf16>
    tpu.vector_store %arg4[%c0_5, %c0_6], %6 {strides = array<i32>} : memref<4x1176xbf16, #tpu.memory_space<vmem>>, vector<4x1176xbf16>,
    return
  }
  func.func @transform_0(%arg0: i32) -> (i32, i32) {
    %c0_i32 = arith.constant 0 : i32
    %c0_i32_0 = arith.constant 0 : i32
    return %arg0, %c0_i32 : i32, i32
  }
  func.func @transform_1(%arg0: i32) -> (i32, i32) {
    %c0_i32 = arith.constant 0 : i32
    %c0_i32_0 = arith.constant 0 : i32
    %c0_i32_1 = arith.constant 0 : i32
    return %c0_i32, %c0_i32_0 : i32, i32
  }
  func.func @transform_2(%arg0: i32) -> (i32, i32) {
    %c0_i32 = arith.constant 0 : i32
    %c0_i32_0 = arith.constant 0 : i32
    %c0_i32_1 = arith.constant 0 : i32
    return %c0_i32, %c0_i32_0 : i32, i32
  }
  func.func @transform_3(%arg0: i32) -> (i32, i32) {
    %c0_i32 = arith.constant 0 : i32
    %c0_i32_0 = arith.constant 0 : i32
    return %arg0, %c0_i32 : i32, i32
  }
}

module attributes {stable_mosaic.version = 11 : i64} {
  func.func @kernel(%arg0: i32, %arg1: memref<196x216xbf16, #tpu.memory_space<vmem>>, %arg2: memref<216x96xbf16, #tpu.memory_space<vmem>>, %arg3: memref<1x96xf32, #tpu.memory_space<vmem>>, %arg4: memref<196x96xbf16, #tpu.memory_space<vmem>>) attributes {dimension_semantics = [#tpu.dimension_semantics<parallel>], iteration_bounds = array<i64: 1>, scalar_prefetch = 0 : i64, scratch_operands = 0 : i64, tpu.core_type = #tpu.core_type<tc>, window_params = [{transform_indices = @transform_0, window_bounds = array<i64: 196, 216>}, {pipeline_mode = #tpu.pipeline_mode<synchronous>, transform_indices = @transform_1, window_bounds = array<i64: 216, 96>}, {pipeline_mode = #tpu.pipeline_mode<synchronous>, transform_indices = @transform_2, window_bounds = array<i64: 1, 96>}, {transform_indices = @transform_3, window_bounds = array<i64: 196, 96>}]} {
    %c0 = arith.constant 0 : index
    %c0_0 = arith.constant 0 : index
    %0 = vector.load %arg1[%c0, %c0_0] : memref<196x216xbf16, #tpu.memory_space<vmem>>, vector<196x216xbf16>
    %c0_1 = arith.constant 0 : index
    %c0_2 = arith.constant 0 : index
    %1 = vector.load %arg2[%c0_1, %c0_2] : memref<216x96xbf16, #tpu.memory_space<vmem>>, vector<216x96xbf16>
    %cst = arith.constant dense<0.000000e+00> : vector<196x96xf32>
    %2 = tpu.matmul %0, %1, %cst {dimension_numbers = #tpu.dot_dimension_numbers<[1], [0], [0], [1], [0, 0, 1, 1], [], []>} : vector<196x216xbf16>, vector<216x96xbf16>, vector<196x96xf32> -> vector<196x96xf32>
    %c0_3 = arith.constant 0 : index
    %c0_4 = arith.constant 0 : index
    %3 = vector.load %arg3[%c0_3, %c0_4] : memref<1x96xf32, #tpu.memory_space<vmem>>, vector<1x96xf32>
    %4 = vector.broadcast %3 : vector<1x96xf32> to vector<196x96xf32>
    %5 = arith.addf %2, %4 : vector<196x96xf32>
    %cst_5 = arith.constant 0.000000e+00 : f32
    %6 = vector.broadcast %cst_5 : f32 to vector<196x96xf32>
    %7 = arith.maximumf %5, %6 : vector<196x96xf32>
    %8 = arith.truncf %7 : vector<196x96xf32> to vector<196x96xbf16>
    %c0_6 = arith.constant 0 : index
    %c0_7 = arith.constant 0 : index
    %9 = vector.load %arg4[%c0_6, %c0_7] : memref<196x96xbf16, #tpu.memory_space<vmem>>, vector<196x96xbf16>
    tpu.vector_store %arg4[%c0_6, %c0_7], %8 {strides = array<i32>} : memref<196x96xbf16, #tpu.memory_space<vmem>>, vector<196x96xbf16>,
    return
  }
  func.func @transform_0(%arg0: i32) -> (i32, i32) {
    %c0_i32 = arith.constant 0 : i32
    %c0_i32_0 = arith.constant 0 : i32
    return %arg0, %c0_i32 : i32, i32
  }
  func.func @transform_1(%arg0: i32) -> (i32, i32) {
    %c0_i32 = arith.constant 0 : i32
    %c0_i32_0 = arith.constant 0 : i32
    %c0_i32_1 = arith.constant 0 : i32
    return %c0_i32, %c0_i32_0 : i32, i32
  }
  func.func @transform_2(%arg0: i32) -> (i32, i32) {
    %c0_i32 = arith.constant 0 : i32
    %c0_i32_0 = arith.constant 0 : i32
    %c0_i32_1 = arith.constant 0 : i32
    return %c0_i32, %c0_i32_0 : i32, i32
  }
  func.func @transform_3(%arg0: i32) -> (i32, i32) {
    %c0_i32 = arith.constant 0 : i32
    %c0_i32_0 = arith.constant 0 : i32
    return %arg0, %c0_i32 : i32, i32
  }
}

module attributes {stable_mosaic.version = 11 : i64} {
  func.func @kernel(%arg0: i32, %arg1: memref<784x216xbf16, #tpu.memory_space<vmem>>, %arg2: memref<216x48xbf16, #tpu.memory_space<vmem>>, %arg3: memref<1x48xf32, #tpu.memory_space<vmem>>, %arg4: memref<784x48xbf16, #tpu.memory_space<vmem>>) attributes {dimension_semantics = [#tpu.dimension_semantics<parallel>], iteration_bounds = array<i64: 1>, scalar_prefetch = 0 : i64, scratch_operands = 0 : i64, tpu.core_type = #tpu.core_type<tc>, window_params = [{transform_indices = @transform_0, window_bounds = array<i64: 784, 216>}, {pipeline_mode = #tpu.pipeline_mode<synchronous>, transform_indices = @transform_1, window_bounds = array<i64: 216, 48>}, {pipeline_mode = #tpu.pipeline_mode<synchronous>, transform_indices = @transform_2, window_bounds = array<i64: 1, 48>}, {transform_indices = @transform_3, window_bounds = array<i64: 784, 48>}]} {
    %c0 = arith.constant 0 : index
    %c0_0 = arith.constant 0 : index
    %0 = vector.load %arg1[%c0, %c0_0] : memref<784x216xbf16, #tpu.memory_space<vmem>>, vector<784x216xbf16>
    %c0_1 = arith.constant 0 : index
    %c0_2 = arith.constant 0 : index
    %1 = vector.load %arg2[%c0_1, %c0_2] : memref<216x48xbf16, #tpu.memory_space<vmem>>, vector<216x48xbf16>
    %cst = arith.constant dense<0.000000e+00> : vector<784x48xf32>
    %2 = tpu.matmul %0, %1, %cst {dimension_numbers = #tpu.dot_dimension_numbers<[1], [0], [0], [1], [0, 0, 1, 1], [], []>} : vector<784x216xbf16>, vector<216x48xbf16>, vector<784x48xf32> -> vector<784x48xf32>
    %c0_3 = arith.constant 0 : index
    %c0_4 = arith.constant 0 : index
    %3 = vector.load %arg3[%c0_3, %c0_4] : memref<1x48xf32, #tpu.memory_space<vmem>>, vector<1x48xf32>
    %4 = vector.broadcast %3 : vector<1x48xf32> to vector<784x48xf32>
    %5 = arith.addf %2, %4 : vector<784x48xf32>
    %cst_5 = arith.constant 0.000000e+00 : f32
    %6 = vector.broadcast %cst_5 : f32 to vector<784x48xf32>
    %7 = arith.maximumf %5, %6 : vector<784x48xf32>
    %8 = arith.truncf %7 : vector<784x48xf32> to vector<784x48xbf16>
    %c0_6 = arith.constant 0 : index
    %c0_7 = arith.constant 0 : index
    %9 = vector.load %arg4[%c0_6, %c0_7] : memref<784x48xbf16, #tpu.memory_space<vmem>>, vector<784x48xbf16>
    tpu.vector_store %arg4[%c0_6, %c0_7], %8 {strides = array<i32>} : memref<784x48xbf16, #tpu.memory_space<vmem>>, vector<784x48xbf16>,
    return
  }
  func.func @transform_0(%arg0: i32) -> (i32, i32) {
    %c0_i32 = arith.constant 0 : i32
    %c0_i32_0 = arith.constant 0 : i32
    return %arg0, %c0_i32 : i32, i32
  }
  func.func @transform_1(%arg0: i32) -> (i32, i32) {
    %c0_i32 = arith.constant 0 : i32
    %c0_i32_0 = arith.constant 0 : i32
    %c0_i32_1 = arith.constant 0 : i32
    return %c0_i32, %c0_i32_0 : i32, i32
  }
  func.func @transform_2(%arg0: i32) -> (i32, i32) {
    %c0_i32 = arith.constant 0 : i32
    %c0_i32_0 = arith.constant 0 : i32
    %c0_i32_1 = arith.constant 0 : i32
    return %c0_i32, %c0_i32_0 : i32, i32
  }
  func.func @transform_3(%arg0: i32) -> (i32, i32) {
    %c0_i32 = arith.constant 0 : i32
    %c0_i32_0 = arith.constant 0 : i32
    return %arg0, %c0_i32 : i32, i32
  }
}

module attributes {stable_mosaic.version = 11 : i64} {
  func.func @kernel(%arg0: i32, %arg1: memref<2048x108xbf16, #tpu.memory_space<vmem>>, %arg2: memref<108x24xbf16, #tpu.memory_space<vmem>>, %arg3: memref<1x24xf32, #tpu.memory_space<vmem>>, %arg4: memref<2048x24xbf16, #tpu.memory_space<vmem>>) attributes {dimension_semantics = [#tpu.dimension_semantics<parallel>], iteration_bounds = array<i64: 2>, scalar_prefetch = 0 : i64, scratch_operands = 0 : i64, tpu.core_type = #tpu.core_type<tc>, window_params = [{transform_indices = @transform_0, window_bounds = array<i64: 2048, 108>}, {pipeline_mode = #tpu.pipeline_mode<synchronous>, transform_indices = @transform_1, window_bounds = array<i64: 108, 24>}, {pipeline_mode = #tpu.pipeline_mode<synchronous>, transform_indices = @transform_2, window_bounds = array<i64: 1, 24>}, {transform_indices = @transform_3, window_bounds = array<i64: 2048, 24>}]} {
    %c0 = arith.constant 0 : index
    %c0_0 = arith.constant 0 : index
    %0 = vector.load %arg1[%c0, %c0_0] : memref<2048x108xbf16, #tpu.memory_space<vmem>>, vector<2048x108xbf16>
    %c0_1 = arith.constant 0 : index
    %c0_2 = arith.constant 0 : index
    %1 = vector.load %arg2[%c0_1, %c0_2] : memref<108x24xbf16, #tpu.memory_space<vmem>>, vector<108x24xbf16>
    %cst = arith.constant dense<0.000000e+00> : vector<2048x24xf32>
    %2 = tpu.matmul %0, %1, %cst {dimension_numbers = #tpu.dot_dimension_numbers<[1], [0], [0], [1], [0, 0, 1, 1], [], []>} : vector<2048x108xbf16>, vector<108x24xbf16>, vector<2048x24xf32> -> vector<2048x24xf32>
    %c0_3 = arith.constant 0 : index
    %c0_4 = arith.constant 0 : index
    %3 = vector.load %arg3[%c0_3, %c0_4] : memref<1x24xf32, #tpu.memory_space<vmem>>, vector<1x24xf32>
    %4 = vector.broadcast %3 : vector<1x24xf32> to vector<2048x24xf32>
    %5 = arith.addf %2, %4 : vector<2048x24xf32>
    %cst_5 = arith.constant 0.000000e+00 : f32
    %6 = vector.broadcast %cst_5 : f32 to vector<2048x24xf32>
    %7 = arith.maximumf %5, %6 : vector<2048x24xf32>
    %8 = arith.truncf %7 : vector<2048x24xf32> to vector<2048x24xbf16>
    %c0_6 = arith.constant 0 : index
    %c0_7 = arith.constant 0 : index
    %9 = vector.load %arg4[%c0_6, %c0_7] : memref<2048x24xbf16, #tpu.memory_space<vmem>>, vector<2048x24xbf16>
    tpu.vector_store %arg4[%c0_6, %c0_7], %8 {strides = array<i32>} : memref<2048x24xbf16, #tpu.memory_space<vmem>>, vector<2048x24xbf16>,
    return
  }
  func.func @transform_0(%arg0: i32) -> (i32, i32) {
    %c0_i32 = arith.constant 0 : i32
    %c0_i32_0 = arith.constant 0 : i32
    return %arg0, %c0_i32 : i32, i32
  }
  func.func @transform_1(%arg0: i32) -> (i32, i32) {
    %c0_i32 = arith.constant 0 : i32
    %c0_i32_0 = arith.constant 0 : i32
    %c0_i32_1 = arith.constant 0 : i32
    return %c0_i32, %c0_i32_0 : i32, i32
  }
  func.func @transform_2(%arg0: i32) -> (i32, i32) {
    %c0_i32 = arith.constant 0 : i32
    %c0_i32_0 = arith.constant 0 : i32
    %c0_i32_1 = arith.constant 0 : i32
    return %c0_i32, %c0_i32_0 : i32, i32
  }
  func.func @transform_3(%arg0: i32) -> (i32, i32) {
    %c0_i32 = arith.constant 0 : i32
    %c0_i32_0 = arith.constant 0 : i32
    return %arg0, %c0_i32 : i32, i32
  }
}

module attributes {stable_mosaic.version = 11 : i64} {
  func.func @kernel(%arg0: i32, %arg1: memref<2048x54xbf16, #tpu.memory_space<vmem>>, %arg2: memref<54x24xbf16, #tpu.memory_space<vmem>>, %arg3: memref<1x24xf32, #tpu.memory_space<vmem>>, %arg4: memref<2048x24xbf16, #tpu.memory_space<vmem>>) attributes {dimension_semantics = [#tpu.dimension_semantics<parallel>], iteration_bounds = array<i64: 7>, scalar_prefetch = 0 : i64, scratch_operands = 0 : i64, tpu.core_type = #tpu.core_type<tc>, window_params = [{transform_indices = @transform_0, window_bounds = array<i64: 2048, 54>}, {pipeline_mode = #tpu.pipeline_mode<synchronous>, transform_indices = @transform_1, window_bounds = array<i64: 54, 24>}, {pipeline_mode = #tpu.pipeline_mode<synchronous>, transform_indices = @transform_2, window_bounds = array<i64: 1, 24>}, {transform_indices = @transform_3, window_bounds = array<i64: 2048, 24>}]} {
    %c0 = arith.constant 0 : index
    %c0_0 = arith.constant 0 : index
    %0 = vector.load %arg1[%c0, %c0_0] : memref<2048x54xbf16, #tpu.memory_space<vmem>>, vector<2048x54xbf16>
    %c0_1 = arith.constant 0 : index
    %c0_2 = arith.constant 0 : index
    %1 = vector.load %arg2[%c0_1, %c0_2] : memref<54x24xbf16, #tpu.memory_space<vmem>>, vector<54x24xbf16>
    %cst = arith.constant dense<0.000000e+00> : vector<2048x24xf32>
    %2 = tpu.matmul %0, %1, %cst {dimension_numbers = #tpu.dot_dimension_numbers<[1], [0], [0], [1], [0, 0, 1, 1], [], []>} : vector<2048x54xbf16>, vector<54x24xbf16>, vector<2048x24xf32> -> vector<2048x24xf32>
    %c0_3 = arith.constant 0 : index
    %c0_4 = arith.constant 0 : index
    %3 = vector.load %arg3[%c0_3, %c0_4] : memref<1x24xf32, #tpu.memory_space<vmem>>, vector<1x24xf32>
    %4 = vector.broadcast %3 : vector<1x24xf32> to vector<2048x24xf32>
    %5 = arith.addf %2, %4 : vector<2048x24xf32>
    %cst_5 = arith.constant 0.000000e+00 : f32
    %6 = vector.broadcast %cst_5 : f32 to vector<2048x24xf32>
    %7 = arith.maximumf %5, %6 : vector<2048x24xf32>
    %8 = arith.truncf %7 : vector<2048x24xf32> to vector<2048x24xbf16>
    %c0_6 = arith.constant 0 : index
    %c0_7 = arith.constant 0 : index
    %9 = vector.load %arg4[%c0_6, %c0_7] : memref<2048x24xbf16, #tpu.memory_space<vmem>>, vector<2048x24xbf16>
    tpu.vector_store %arg4[%c0_6, %c0_7], %8 {strides = array<i32>} : memref<2048x24xbf16, #tpu.memory_space<vmem>>, vector<2048x24xbf16>,
    return
  }
  func.func @transform_0(%arg0: i32) -> (i32, i32) {
    %c0_i32 = arith.constant 0 : i32
    %c0_i32_0 = arith.constant 0 : i32
    return %arg0, %c0_i32 : i32, i32
  }
  func.func @transform_1(%arg0: i32) -> (i32, i32) {
    %c0_i32 = arith.constant 0 : i32
    %c0_i32_0 = arith.constant 0 : i32
    %c0_i32_1 = arith.constant 0 : i32
    return %c0_i32, %c0_i32_0 : i32, i32
  }
  func.func @transform_2(%arg0: i32) -> (i32, i32) {
    %c0_i32 = arith.constant 0 : i32
    %c0_i32_0 = arith.constant 0 : i32
    %c0_i32_1 = arith.constant 0 : i32
    return %c0_i32, %c0_i32_0 : i32, i32
  }
  func.func @transform_3(%arg0: i32) -> (i32, i32) {
    %c0_i32 = arith.constant 0 : i32
    %c0_i32_0 = arith.constant 0 : i32
    return %arg0, %c0_i32 : i32, i32
  }
}

module attributes {stable_mosaic.version = 11 : i64} {
  func.func @kernel(%arg0: i32, %arg1: memref<2048x54xbf16, #tpu.memory_space<vmem>>, %arg2: memref<54x12xbf16, #tpu.memory_space<vmem>>, %arg3: memref<1x12xf32, #tpu.memory_space<vmem>>, %arg4: memref<2048x12xf32, #tpu.memory_space<vmem>>) attributes {dimension_semantics = [#tpu.dimension_semantics<parallel>], iteration_bounds = array<i64: 25>, scalar_prefetch = 0 : i64, scratch_operands = 0 : i64, tpu.core_type = #tpu.core_type<tc>, window_params = [{transform_indices = @transform_0, window_bounds = array<i64: 2048, 54>}, {pipeline_mode = #tpu.pipeline_mode<synchronous>, transform_indices = @transform_1, window_bounds = array<i64: 54, 12>}, {pipeline_mode = #tpu.pipeline_mode<synchronous>, transform_indices = @transform_2, window_bounds = array<i64: 1, 12>}, {transform_indices = @transform_3, window_bounds = array<i64: 2048, 12>}]} {
    %c0 = arith.constant 0 : index
    %c0_0 = arith.constant 0 : index
    %0 = vector.load %arg1[%c0, %c0_0] : memref<2048x54xbf16, #tpu.memory_space<vmem>>, vector<2048x54xbf16>
    %c0_1 = arith.constant 0 : index
    %c0_2 = arith.constant 0 : index
    %1 = vector.load %arg2[%c0_1, %c0_2] : memref<54x12xbf16, #tpu.memory_space<vmem>>, vector<54x12xbf16>
    %cst = arith.constant dense<0.000000e+00> : vector<2048x12xf32>
    %2 = tpu.matmul %0, %1, %cst {dimension_numbers = #tpu.dot_dimension_numbers<[1], [0], [0], [1], [0, 0, 1, 1], [], []>} : vector<2048x54xbf16>, vector<54x12xbf16>, vector<2048x12xf32> -> vector<2048x12xf32>
    %c0_3 = arith.constant 0 : index
    %c0_4 = arith.constant 0 : index
    %3 = vector.load %arg3[%c0_3, %c0_4] : memref<1x12xf32, #tpu.memory_space<vmem>>, vector<1x12xf32>
    %4 = vector.broadcast %3 : vector<1x12xf32> to vector<2048x12xf32>
    %5 = arith.addf %2, %4 : vector<2048x12xf32>
    %6 = math.tanh %5 : vector<2048x12xf32>
    %c0_5 = arith.constant 0 : index
    %c0_6 = arith.constant 0 : index
    %7 = vector.load %arg4[%c0_5, %c0_6] : memref<2048x12xf32, #tpu.memory_space<vmem>>, vector<2048x12xf32>
    tpu.vector_store %arg4[%c0_5, %c0_6], %6 {strides = array<i32>} : memref<2048x12xf32, #tpu.memory_space<vmem>>, vector<2048x12xf32>,
    return
  }
  func.func @transform_0(%arg0: i32) -> (i32, i32) {
    %c0_i32 = arith.constant 0 : i32
    %c0_i32_0 = arith.constant 0 : i32
    return %arg0, %c0_i32 : i32, i32
  }
  func.func @transform_1(%arg0: i32) -> (i32, i32) {
    %c0_i32 = arith.constant 0 : i32
    %c0_i32_0 = arith.constant 0 : i32
    %c0_i32_1 = arith.constant 0 : i32
    return %c0_i32, %c0_i32_0 : i32, i32
  }
  func.func @transform_2(%arg0: i32) -> (i32, i32) {
    %c0_i32 = arith.constant 0 : i32
    %c0_i32_0 = arith.constant 0 : i32
    %c0_i32_1 = arith.constant 0 : i32
    return %c0_i32, %c0_i32_0 : i32, i32
  }
  func.func @transform_3(%arg0: i32) -> (i32, i32) {
    %c0_i32 = arith.constant 0 : i32
    %c0_i32_0 = arith.constant 0 : i32
    return %arg0, %c0_i32 : i32, i32
  }
}

</mosaic_0001>

<llo_original>
// kernel: tile.22
$region0: #{tile.22}
  #allocation0 [shape = 's32[1]{0}', space=sflag, size = 0x4, scoped, tag = 'scoped memory for tile.22']
  %s0 = inlined_call_operand.vmem [shape: f32[24], index: 0, kind: input, shape index: {}]
  %s1 = inlined_call_operand.vmem [shape: f32[4,1,1,24], index: 1, kind: output, shape index: {}]
  // Predicated region
  $region2: #{tile.22} parent=0 // pred_check
    _
  $region3: #{tile.22} parent=0 // pred_check_branch
    %3 = sbr.rel (0) target = $region5
  $region4: #{tile.22} parent=0 // pred_region
    _
  $region5: #{tile.22} parent=0 // pred_fallthru
    _
  %v4 = vld [vmem:[%s0] ss:$0 sm:$0xff]
  %5 = vst [vmem:[%s1] sm:$0xf] %v4

// kernel: tile.23
$region0: #{tile.23}
  %s0 = inlined_call_operand.vmem [shape: f32[4,1,1,24], index: 0, kind: input, shape index: {}]
  %s1 = inlined_call_operand.vmem [shape: f32[1,96], index: 1, kind: output, shape index: {}]
  $region1: #{tile.23} parent=0
    #allocation0 [shape = 'u8[4096]{0}', space=vmem, size = 0x1000, scoped, tag = 'scoped mem for output reshape']
    #allocation1 [shape = 'u8[4096]{0}', space=vmem, size = 0x1000, scoped, tag = 'scoped mem for input reshape']
    %s3 = sshllo.u32 0, 4
    %v4 = vld [vmem:[%s0] sm:%s3]
    %5 = vst [vmem:[#allocation1] sm:%s3] %v4
    %v6 = vld [vmem:[#allocation1] sm:$0x1]
    %vm7 = vcmask 195584
    %8 = vst.msk [vmem:[#allocation0] sm:$0x1] %vm7, %v6
    %s9 = scalar_lea.vmem [#allocation1], 3
    %v10 = vld [vmem:[%s9] sm:$0x1]
    %11 = vrot.lane.b32.xlu0 %v10, 72
    %v12 = vpop.permute.xlu0 %11
    %vm13 = vcmask 785984
    %14 = vst.msk [vmem:[#allocation0] sm:$0x1] %vm13, %v12
    %s15 = scalar_lea.vmem [#allocation1], 2
    %v16 = vld [vmem:[%s15] sm:$0x1]
    %17 = vrot.lane.b32.xlu0 %v16, 48
    %v18 = vpop.permute.xlu0 %17
    %vm19 = vcmask 589184
    %20 = vst.msk [vmem:[#allocation0] sm:$0x1] %vm19, %v18
    %s21 = scalar_lea.vmem [#allocation1], 1
    %v22 = vld [vmem:[%s21] sm:$0x1]
    %23 = vrot.lane.b32.xlu0 %v22, 24
    %v24 = vpop.permute.xlu0 %23
    %vm25 = vcmask 392384
    %26 = vst.msk [vmem:[#allocation0] sm:$0x1] %vm25, %v24
    %s28 = sshllo.u32 0, 1
    %v30 = vld [vmem:[#allocation0] sm:%s28]
    %s31 = sshllo.u32 0, 1
    %32 = vst [vmem:[%s1] sm:%s31] %v30

// kernel: tile.26
$region0: #{tile.26}
  #allocation0 [shape = 's32[1]{0}', space=sflag, size = 0x4, scoped, tag = 'scoped memory for tile.26']
  %s0 = inlined_call_operand.vmem [shape: f32[12], index: 0, kind: input, shape index: {}]
  %s1 = inlined_call_operand.vmem [shape: f32[4,1,1,12], index: 1, kind: output, shape index: {}]
  // Predicated region
  $region2: #{tile.26} parent=0 // pred_check
    _
  $region3: #{tile.26} parent=0 // pred_check_branch
    %3 = sbr.rel (0) target = $region5
  $region4: #{tile.26} parent=0 // pred_region
    _
  $region5: #{tile.26} parent=0 // pred_fallthru
    _
  %v4 = vld [vmem:[%s0] ss:$0 sm:$0xff]
  %5 = vst [vmem:[%s1] sm:$0xf] %v4

// kernel: tile.27
$region0: #{tile.27}
  %s0 = inlined_call_operand.vmem [shape: f32[4,1,1,12], index: 0, kind: input, shape index: {}]
  %s1 = inlined_call_operand.vmem [shape: f32[1,48], index: 1, kind: output, shape index: {}]
  $region1: #{tile.27} parent=0
    #allocation0 [shape = 'u8[4096]{0}', space=vmem, size = 0x1000, scoped, tag = 'scoped mem for output reshape']
    #allocation1 [shape = 'u8[4096]{0}', space=vmem, size = 0x1000, scoped, tag = 'scoped mem for input reshape']
    %s3 = sshllo.u32 0, 4
    %v4 = vld [vmem:[%s0] sm:%s3]
    %5 = vst [vmem:[#allocation1] sm:%s3] %v4
    %v6 = vld [vmem:[#allocation1] sm:$0x1]
    %vm7 = vcmask 97280
    %8 = vst.msk [vmem:[#allocation0] sm:$0x1] %vm7, %v6
    %s9 = scalar_lea.vmem [#allocation1], 3
    %v10 = vld [vmem:[%s9] sm:$0x1]
    %11 = vrot.lane.b32.xlu0 %v10, 36
    %v12 = vpop.permute.xlu0 %11
    %vm13 = vcmask 392480
    %14 = vst.msk [vmem:[#allocation0] sm:$0x1] %vm13, %v12
    %s15 = scalar_lea.vmem [#allocation1], 2
    %v16 = vld [vmem:[%s15] sm:$0x1]
    %17 = vrot.lane.b32.xlu0 %v16, 24
    %v18 = vpop.permute.xlu0 %17
    %vm19 = vcmask 294080
    %20 = vst.msk [vmem:[#allocation0] sm:$0x1] %vm19, %v18
    %s21 = scalar_lea.vmem [#allocation1], 1
    %v22 = vld [vmem:[%s21] sm:$0x1]
    %23 = vrot.lane.b32.xlu0 %v22, 12
    %v24 = vpop.permute.xlu0 %23
    %vm25 = vcmask 195680
    %26 = vst.msk [vmem:[#allocation0] sm:$0x1] %vm25, %v24
    %s28 = sshllo.u32 0, 1
    %v30 = vld [vmem:[#allocation0] sm:%s28]
    %s31 = sshllo.u32 0, 1
    %32 = vst [vmem:[%s1] sm:%s31] %v30

// kernel: tile.30
$region0: #{tile.30}
  #allocation0 [shape = 's32[1]{0}', space=sflag, size = 0x4, scoped, tag = 'scoped memory for tile.30']
  %s0 = inlined_call_operand.vmem [shape: f32[6], index: 0, kind: input, shape index: {}]
  %s1 = inlined_call_operand.vmem [shape: f32[4,1,1,6], index: 1, kind: output, shape index: {}]
  // Predicated region
  $region2: #{tile.30} parent=0 // pred_check
    _
  $region3: #{tile.30} parent=0 // pred_check_branch
    %3 = sbr.rel (0) target = $region5
  $region4: #{tile.30} parent=0 // pred_region
    _
  $region5: #{tile.30} parent=0 // pred_fallthru
    _
  %v4 = vld [vmem:[%s0] ss:$0 sm:$0xff]
  %5 = vst [vmem:[%s1] sm:$0xf] %v4

// kernel: tile.31
$region0: #{tile.31}
  %s0 = inlined_call_operand.vmem [shape: f32[4,1,1,6], index: 0, kind: input, shape index: {}]
  %s1 = inlined_call_operand.vmem [shape: f32[1,24], index: 1, kind: output, shape index: {}]
  $region1: #{tile.31} parent=0
    #allocation0 [shape = 'u8[4096]{0}', space=vmem, size = 0x1000, scoped, tag = 'scoped mem for output reshape']
    #allocation1 [shape = 'u8[4096]{0}', space=vmem, size = 0x1000, scoped, tag = 'scoped mem for input reshape']
    %s3 = sshllo.u32 0, 4
    %v4 = vld [vmem:[%s0] sm:%s3]
    %5 = vst [vmem:[#allocation1] sm:%s3] %v4
    %v6 = vld [vmem:[#allocation1] sm:$0x1]
    %vm7 = vcmask 48128
    %8 = vst.msk [vmem:[#allocation0] sm:$0x1] %vm7, %v6
    %s9 = scalar_lea.vmem [#allocation1], 3
    %v10 = vld [vmem:[%s9] sm:$0x1]
    %11 = vrot.lane.b32.xlu0 %v10, 18
    %v12 = vpop.permute.xlu0 %11
    %vm13 = vcmask 195728
    %14 = vst.msk [vmem:[#allocation0] sm:$0x1] %vm13, %v12
    %s15 = scalar_lea.vmem [#allocation1], 2
    %v16 = vld [vmem:[%s15] sm:$0x1]
    %17 = vrot.lane.b32.xlu0 %v16, 12
    %v18 = vpop.permute.xlu0 %17
    %vm19 = vcmask 146528
    %20 = vst.msk [vmem:[#allocation0] sm:$0x1] %vm19, %v18
    %s21 = scalar_lea.vmem [#allocation1], 1
    %v22 = vld [vmem:[%s21] sm:$0x1]
    %23 = vrot.lane.b32.xlu0 %v22, 6
    %v24 = vpop.permute.xlu0 %23
    %vm25 = vcmask 97328
    %26 = vst.msk [vmem:[#allocation0] sm:$0x1] %vm25, %v24
    %s28 = sshllo.u32 0, 1
    %v30 = vld [vmem:[#allocation0] sm:%s28]
    %s31 = sshllo.u32 0, 1
    %32 = vst [vmem:[%s1] sm:%s31] %v30

// kernel: tile.38
$region0: #{tile.38}
  #allocation0 [shape = 's32[1]{0}', space=sflag, size = 0x4, scoped, tag = 'scoped memory for tile.38']
  %s0 = inlined_call_operand.vmem [shape: f32[3], index: 0, kind: input, shape index: {}]
  %s1 = inlined_call_operand.vmem [shape: f32[4,1,1,3], index: 1, kind: output, shape index: {}]
  // Predicated region
  $region2: #{tile.38} parent=0 // pred_check
    _
  $region3: #{tile.38} parent=0 // pred_check_branch
    %3 = sbr.rel (0) target = $region5
  $region4: #{tile.38} parent=0 // pred_region
    _
  $region5: #{tile.38} parent=0 // pred_fallthru
    _
  %v4 = vld [vmem:[%s0] ss:$0 sm:$0xff]
  %5 = vst [vmem:[%s1] sm:$0xf] %v4

// kernel: tile.39
$region0: #{tile.39}
  %s0 = inlined_call_operand.vmem [shape: f32[4,1,1,3], index: 0, kind: input, shape index: {}]
  %s1 = inlined_call_operand.vmem [shape: f32[1,12], index: 1, kind: output, shape index: {}]
  $region1: #{tile.39} parent=0
    #allocation0 [shape = 'u8[4096]{0}', space=vmem, size = 0x1000, scoped, tag = 'scoped mem for output reshape']
    #allocation1 [shape = 'u8[4096]{0}', space=vmem, size = 0x1000, scoped, tag = 'scoped mem for input reshape']
    %s3 = sshllo.u32 0, 4
    %v4 = vld [vmem:[%s0] sm:%s3]
    %5 = vst [vmem:[#allocation1] sm:%s3] %v4
    %v6 = vld [vmem:[#allocation1] sm:$0x1]
    %vm7 = vcmask 23552
    %8 = vst.msk [vmem:[#allocation0] sm:$0x1] %vm7, %v6
    %s9 = scalar_lea.vmem [#allocation1], 3
    %v10 = vld [vmem:[%s9] sm:$0x1]
    %11 = vrot.lane.b32.xlu0 %v10, 9
    %v12 = vpop.permute.xlu0 %11
    %vm13 = vcmask 97352
    %14 = vst.msk [vmem:[#allocation0] sm:$0x1] %vm13, %v12
    %s15 = scalar_lea.vmem [#allocation1], 2
    %v16 = vld [vmem:[%s15] sm:$0x1]
    %17 = vrot.lane.b32.xlu0 %v16, 6
    %v18 = vpop.permute.xlu0 %17
    %vm19 = vcmask 72752
    %20 = vst.msk [vmem:[#allocation0] sm:$0x1] %vm19, %v18
    %s21 = scalar_lea.vmem [#allocation1], 1
    %v22 = vld [vmem:[%s21] sm:$0x1]
    %23 = vrot.lane.b32.xlu0 %v22, 3
    %v24 = vpop.permute.xlu0 %23
    %vm25 = vcmask 48152
    %26 = vst.msk [vmem:[#allocation0] sm:$0x1] %vm25, %v24
    %s28 = sshllo.u32 0, 1
    %v30 = vld [vmem:[#allocation0] sm:%s28]
    %s31 = sshllo.u32 0, 1
    %32 = vst [vmem:[%s1] sm:%s31] %v30

</llo_original>
